<compile_context>
chip_gen: v5e
topology: v5e:2x2
jax: 0.10.0
libtpu: 0.0.40
codegen_flags: <defaults>
</compile_context>

<pallas_src>
import functools
import math

import jax
import jax.numpy as jnp
from jax.experimental import pallas as pl
from jax.experimental.pallas import tpu as pltpu


def _divisors(n):
    return [d for d in range(1, n + 1) if n % d == 0]


def _pick_head_group(num_heads, head_dim, target_lanes=256):
    """Smallest group G (divisor of H) with G*dh a multiple of 128 (prefer >= 256 lanes)."""
    lane_ok = [g for g in _divisors(num_heads) if (g * head_dim) % 128 == 0]
    for g in lane_ok:
        if g * head_dim >= target_lanes:
            return g
    if lane_ok:
        return lane_ok[-1]
    # Fall back to all heads in one group: G*dh == D equals the full feature dim,
    # so the output block stays unmasked.
    return num_heads


def _pick_q_block(seq_q, target=256):
    cands = [d for d in _divisors(seq_q) if d % 8 == 0 and d <= target]
    return max(cands) if cands else seq_q


def _mha_kernel(q_ref, k_ref, kmask_ref, qmask_ref,
                wq_ref, bq_ref, wk_ref, bk_ref, wv_ref, bv_ref,
                out_ref, attn_ref,
                kh_ref, vh_ref,
                *, heads_per_group, head_dim, causal):
    G, dh = heads_per_group, head_dim
    qt = pl.program_id(2)

    # ---- K/V projection for this (batch, head-group): once per group, reused
    # across every Tq tile (qt axis is innermost + "arbitrary").
    @pl.when(qt == 0)
    def _project_kv():
        k = k_ref[0]                                                        # (Tk, D) bf16
        kh = jnp.dot(k, wk_ref[0], preferred_element_type=jnp.float32) + bk_ref[0]
        vh = jnp.dot(k, wv_ref[0], preferred_element_type=jnp.float32) + bv_ref[0]
        kh_ref[...] = kh.astype(kh_ref.dtype)                               # (Tk, G*dh) bf16
        vh_ref[...] = vh.astype(vh_ref.dtype)

    # ---- Q projection for this Tq tile (1/sqrt(dh) already folded into wq/bq).
    q = q_ref[0]                                                            # (tq, D) bf16
    qh = jnp.dot(q, wq_ref[0], preferred_element_type=jnp.float32) + bq_ref[0]
    qh = qh.astype(jnp.bfloat16)                                            # (tq, G*dh)

    tq = qh.shape[0]
    tk = kh_ref.shape[0]

    # Precomputed padding masks (loaded once per step, broadcast below).
    key_keep = kmask_ref[0] > 0.0                                           # (1, Tk) bool
    q_keep = qmask_ref[0]                                                   # (tq, 1) f32 in {0,1}

    if causal:
        row = jax.lax.broadcasted_iota(jnp.int32, (tq, tk), 0) + qt * tq    # global query row
        col = jax.lax.broadcasted_iota(jnp.int32, (tq, tk), 1)
        causal_keep = col <= row

    # ---- Per-head scores / softmax / context (G is a small static constant).
    for j in range(G):
        lo = j * dh
        # scores: (tq, Tk) f32, already scaled by 1/sqrt(dh) via qh.
        s = jax.lax.dot_general(qh[:, lo:lo + dh], kh_ref[:, lo:lo + dh],
                                (((1,), (1,)), ((), ())),
                                preferred_element_type=jnp.float32)
        s = jnp.where(key_keep, s, -jnp.inf)
        if causal:
            s = jnp.where(causal_keep, s, -jnp.inf)

        # softmax with torch's  softmax -> nan_to_num(0)  semantics
        # (fully-masked row produces exactly 0).
        m = jnp.max(s, axis=-1, keepdims=True)
        m = jnp.where(m > -jnp.inf, m, 0.0)             # avoid (-inf) - (-inf)
        e = jnp.exp(s - m)                              # masked entries -> 0
        denom = jnp.sum(e, axis=-1, keepdims=True)
        inv = pl.reciprocal(jnp.where(denom > 0.0, denom, 1.0), approx=True)
        p = e * inv * q_keep                            # query-padding rows -> 0

        attn_ref[0, j] = p.astype(attn_ref.dtype)

        # TODO(synk): training-mode dropout (p=0.5) not applied; eval-mode identity.
        ctx = jnp.dot(p.astype(jnp.bfloat16), vh_ref[:, lo:lo + dh],
                      preferred_element_type=jnp.float32)                   # (tq, dh)
        out_ref[0, :, lo:lo + dh] = ctx.astype(out_ref.dtype)


def mha_forward(params, queries, keys, *, num_heads, causality=False,
                attn_dtype=jnp.bfloat16, out_dtype=jnp.float32):
    """params = (Wq, bq, Wk, bk, Wv, bv) with torch nn.Linear layout (out, in)."""
    Wq, bq, Wk, bk, Wv, bv = params
    B, Tq, D = queries.shape
    Tk = keys.shape[1]
    H = num_heads
    assert D % H == 0, "dim must be divisible by num_heads"
    dh = D // H
    scale = 1.0 / math.sqrt(dh)

    G = _pick_head_group(H, dh)
    n_groups = H // G
    block_q = _pick_q_block(Tq)
    n_q = Tq // block_q

    # Grouped weight slabs: (n_groups, D, G*dh), already bf16 (MXU feed).
    # torch Linear: y = x @ W.T + b; feature f = h*dh + d is head-major, so a
    # plain reshape of W.T gives groups of G consecutive heads.
    def grouped(W, pre_scale=1.0):
        w = (W.T * pre_scale).reshape(D, n_groups, G * dh)
        return jnp.transpose(w, (1, 0, 2)).astype(jnp.bfloat16)

    wq_g = grouped(Wq, scale)                       # 1/sqrt(dh) folded into Q proj
    wk_g = grouped(Wk)
    wv_g = grouped(Wv)
    bq_g = (bq * scale).reshape(n_groups, 1, G * dh).astype(jnp.float32)
    bk_g = bk.reshape(n_groups, 1, G * dh).astype(jnp.float32)
    bv_g = bv.reshape(n_groups, 1, G * dh).astype(jnp.float32)

    # Padding masks computed once, from the original f32 inputs (torch semantics).
    kmask = jnp.sign(jnp.sum(jnp.abs(keys), axis=-1)).astype(jnp.float32).reshape(B, 1, Tk)
    qmask = jnp.sign(jnp.sum(jnp.abs(queries), axis=-1)).astype(jnp.float32).reshape(B, Tq, 1)

    q_bf = queries.astype(jnp.bfloat16)
    k_bf = keys.astype(jnp.bfloat16)

    q_spec = pl.BlockSpec((1, block_q, D), lambda b, g, t: (b, t, 0))
    k_spec = pl.BlockSpec((1, Tk, D), lambda b, g, t: (b, 0, 0))
    kmask_spec = pl.BlockSpec((1, 1, Tk), lambda b, g, t: (b, 0, 0))
    qmask_spec = pl.BlockSpec((1, block_q, 1), lambda b, g, t: (b, t, 0))
    w_spec = pl.BlockSpec((1, D, G * dh), lambda b, g, t: (g, 0, 0))
    b_spec = pl.BlockSpec((1, 1, G * dh), lambda b, g, t: (g, 0, 0))
    # Context goes straight into (B, Tq, D): column slice per head group (lane-dense).
    out_spec = pl.BlockSpec((1, block_q, G * dh), lambda b, g, t: (b, t, g))
    attn_spec = pl.BlockSpec((1, G, block_q, Tk), lambda b, g, t: (b, g, t, 0))

    kernel = functools.partial(_mha_kernel, heads_per_group=G, head_dim=dh,
                               causal=bool(causality))

    flops = (2 * B * Tq * D * D                    # Q projection
             + 2 * 2 * B * Tk * D * D              # K and V projections (once per group pass)
             + 2 * 2 * B * H * Tq * Tk * dh)       # QK^T and P@V
    transcendentals = B * H * Tq * Tk
    bytes_accessed = (q_bf.size * 2 + k_bf.size * 2
                      + 3 * D * D * 2 + 3 * D * 4
                      + B * Tk * 4 + B * Tq * 4
                      + B * Tq * D * jnp.dtype(out_dtype).itemsize
                      + B * H * Tq * Tk * jnp.dtype(attn_dtype).itemsize)

    out, attn = pl.pallas_call(
        kernel,
        out_shape=(
            jax.ShapeDtypeStruct((B, Tq, D), out_dtype),       # context, torch layout
            jax.ShapeDtypeStruct((B, H, Tq, Tk), attn_dtype),  # attention weights
        ),
        grid_spec=pltpu.PrefetchScalarGridSpec(
            num_scalar_prefetch=0,
            grid=(B, n_groups, n_q),
            in_specs=[q_spec, k_spec, kmask_spec, qmask_spec,
                      w_spec, b_spec,    # query proj
                      w_spec, b_spec,    # key proj
                      w_spec, b_spec],   # value proj
            out_specs=[out_spec, attn_spec],
            scratch_shapes=[pltpu.VMEM((Tk, G * dh), jnp.bfloat16),   # Kh cache
                            pltpu.VMEM((Tk, G * dh), jnp.bfloat16)],  # Vh cache
        ),
        compiler_params=pltpu.CompilerParams(
            dimension_semantics=("parallel", "parallel", "arbitrary"),
            # Above the 16/32 MiB scoped defaults, below v7x's 64 MiB physical VMEM.
            vmem_limit_bytes=48 * 1024 * 1024),
        cost_estimate=pl.CostEstimate(flops=int(flops),
                                      transcendentals=int(transcendentals),
                                      bytes_accessed=int(bytes_accessed)),
    )(q_bf, k_bf, kmask, qmask, wq_g, bq_g, wk_g, bk_g, wv_g, bv_g)

    return out, attn


def mha_reference(params, queries, keys, *, num_heads, causality=False):
    """Pure-JAX f32 transcription of the PyTorch forward (eval-mode dropout)."""
    Wq, bq, Wk, bk, Wv, bv = params
    B, Tq, D = queries.shape
    Tk = keys.shape[1]
    H = num_heads
    dh = D // H

    Q = queries @ Wq.T + bq
    K = keys @ Wk.T + bk
    V = keys @ Wv.T + bv
    Q_ = jnp.concatenate(jnp.split(Q, H, axis=2), axis=0)
    K_ = jnp.concatenate(jnp.split(K, H, axis=2), axis=0)
    V_ = jnp.concatenate(jnp.split(V, H, axis=2), axis=0)

    s = jnp.einsum('bqd,bkd->bqk', Q_, K_) / math.sqrt(dh)
    key_masks = jnp.sign(jnp.sum(jnp.abs(keys), axis=-1))      # (B, Tk)
    key_masks = jnp.tile(key_masks, (H, 1))                    # (H*B, Tk)
    s = jnp.where(key_masks[:, None, :] == 0, -jnp.inf, s)
    if causality:
        tril = jnp.tril(jnp.ones((Tq, Tk), jnp.float32))
        s = jnp.where(tril[None] == 0, -jnp.inf, s)
    p = jax.nn.softmax(s, axis=-1)
    p = jnp.nan_to_num(p, nan=0.0, posinf=0.0, neginf=0.0)
    query_masks = jnp.sign(jnp.sum(jnp.abs(queries), axis=-1))  # (B, Tq)
    query_masks = jnp.tile(query_masks, (H, 1))                 # (H*B, Tq)
    p = p * query_masks[:, :, None]
    attn = jnp.stack(jnp.split(p, H, axis=0), axis=1)           # (B, H, Tq, Tk)
    out = jnp.einsum('bqk,bkd->bqd', p, V_)
    out = jnp.concatenate(jnp.split(out, H, axis=0), axis=2)    # (B, Tq, D)
    return out, attn


if __name__ == "__main__":
    key = jax.random.PRNGKey(0)
    B, Tq, Tk, D, H = 2, 8, 8, 32, 4

    ks = jax.random.split(key, 8)
    queries = jax.random.normal(ks[0], (B, Tq, D), jnp.float32)
    keys = jax.random.normal(ks[1], (B, Tk, D), jnp.float32)
    # Zero out one key row and one query row to exercise the sign() padding masks.
    keys = keys.at[0, Tk - 1].set(0.0)
    queries = queries.at[1, 0].set(0.0)

    Wq = 0.1 * jax.random.normal(ks[2], (D, D), jnp.float32)
    Wk = 0.1 * jax.random.normal(ks[3], (D, D), jnp.float32)
    Wv = 0.1 * jax.random.normal(ks[4], (D, D), jnp.float32)
    bq = 0.1 * jax.random.normal(ks[5], (D,), jnp.float32)
    bk = 0.1 * jax.random.normal(ks[6], (D,), jnp.float32)
    bv = 0.1 * jax.random.normal(ks[7], (D,), jnp.float32)
    params = (Wq, bq, Wk, bk, Wv, bv)

    for causal in (False, True):
        out, attn = mha_forward(params, queries, keys, num_heads=H, causality=causal)
        jax.block_until_ready((out, attn))

        ref_out, ref_attn = mha_reference(params, queries, keys,
                                          num_heads=H, causality=causal)
        assert out.shape == (B, Tq, D), out.shape
        assert attn.shape == (B, H, Tq, Tk), attn.shape
        # bf16 MXU feeds + bf16 attention output -> relaxed tolerances vs f32 reference.
        assert jnp.allclose(attn.astype(jnp.float32), ref_attn,
                            atol=3e-2, rtol=3e-2), f"attn mismatch (causal={causal})"
        assert jnp.allclose(out.astype(jnp.float32), ref_out,
                            atol=5e-2, rtol=5e-2), f"out mismatch (causal={causal})"

    print("KERNEL_OK")
</pallas_src>

<mosaic_0001>
module attributes {stable_mosaic.version = 11 : i64} {
  func.func @_mha_kernel(%arg0: i32, %arg1: i32, %arg2: i32, %arg3: memref<1x8x32xbf16, #tpu.memory_space<vmem>>, %arg4: memref<1x8x32xbf16, #tpu.memory_space<vmem>>, %arg5: memref<1x1x8xf32, #tpu.memory_space<vmem>>, %arg6: memref<1x8x1xf32, #tpu.memory_space<vmem>>, %arg7: memref<1x32x32xbf16, #tpu.memory_space<vmem>>, %arg8: memref<1x1x32xf32, #tpu.memory_space<vmem>>, %arg9: memref<1x32x32xbf16, #tpu.memory_space<vmem>>, %arg10: memref<1x1x32xf32, #tpu.memory_space<vmem>>, %arg11: memref<1x32x32xbf16, #tpu.memory_space<vmem>>, %arg12: memref<1x1x32xf32, #tpu.memory_space<vmem>>, %arg13: memref<1x8x32xf32, #tpu.memory_space<vmem>>, %arg14: memref<1x4x8x8xbf16, #tpu.memory_space<vmem>>, %arg15: memref<8x32xbf16, #tpu.memory_space<vmem>>, %arg16: memref<8x32xbf16, #tpu.memory_space<vmem>>) attributes {dimension_semantics = [#tpu.dimension_semantics<parallel>, #tpu.dimension_semantics<parallel>, #tpu.dimension_semantics<arbitrary>], iteration_bounds = array<i64: 2, 1, 1>, scalar_prefetch = 0 : i64, scratch_operands = 2 : i64, tpu.core_type = #tpu.core_type<tc>, window_params = [{transform_indices = @transform_0, window_bounds = array<i64: 1, 8, 32>}, {transform_indices = @transform_1, window_bounds = array<i64: 1, 8, 32>}, {transform_indices = @transform_2, window_bounds = array<i64: 1, 1, 8>}, {transform_indices = @transform_3, window_bounds = array<i64: 1, 8, 1>}, {transform_indices = @transform_4, window_bounds = array<i64: 1, 32, 32>}, {transform_indices = @transform_5, window_bounds = array<i64: 1, 1, 32>}, {transform_indices = @transform_6, window_bounds = array<i64: 1, 32, 32>}, {transform_indices = @transform_7, window_bounds = array<i64: 1, 1, 32>}, {transform_indices = @transform_8, window_bounds = array<i64: 1, 32, 32>}, {transform_indices = @transform_9, window_bounds = array<i64: 1, 1, 32>}, {transform_indices = @transform_10, window_bounds = array<i64: 1, 8, 32>}, {transform_indices = @transform_11, window_bounds = array<i64: 1, 4, 8, 8>}]} {
    %c0_i32 = arith.constant 0 : i32
    %0 = arith.cmpi eq, %arg2, %c0_i32 : i32
    %1 = arith.extui %0 : i1 to i32
    %c0_i32_0 = arith.constant 0 : i32
    %2 = arith.cmpi ne, %1, %c0_i32_0 : i32
    scf.if %2 {
      %c0_90 = arith.constant 0 : index
      %c0_91 = arith.constant 0 : index
      %c0_92 = arith.constant 0 : index
      %167 = vector.load %arg4[%c0_90, %c0_91, %c0_92] : memref<1x8x32xbf16, #tpu.memory_space<vmem>>, vector<1x8x32xbf16>
      %168 = vector.shape_cast %167 : vector<1x8x32xbf16> to vector<8x32xbf16>
      %c0_93 = arith.constant 0 : index
      %c0_94 = arith.constant 0 : index
      %c0_95 = arith.constant 0 : index
      %169 = vector.load %arg9[%c0_93, %c0_94, %c0_95] : memref<1x32x32xbf16, #tpu.memory_space<vmem>>, vector<1x32x32xbf16>
      %170 = vector.shape_cast %169 : vector<1x32x32xbf16> to vector<32x32xbf16>
      %cst_96 = arith.constant dense<0.000000e+00> : vector<8x32xf32>
      %171 = tpu.matmul %168, %170, %cst_96 {dimension_numbers = #tpu.dot_dimension_numbers<[1], [0], [0], [1], [0, 0, 1, 1], [], []>} : vector<8x32xbf16>, vector<32x32xbf16>, vector<8x32xf32> -> vector<8x32xf32>
      %c0_97 = arith.constant 0 : index
      %c0_98 = arith.constant 0 : index
      %c0_99 = arith.constant 0 : index
      %172 = vector.load %arg10[%c0_97, %c0_98, %c0_99] : memref<1x1x32xf32, #tpu.memory_space<vmem>>, vector<1x1x32xf32>
      %173 = vector.shape_cast %172 : vector<1x1x32xf32> to vector<1x32xf32>
      %174 = vector.broadcast %173 : vector<1x32xf32> to vector<8x32xf32>
      %175 = arith.addf %171, %174 : vector<8x32xf32>
      %c0_100 = arith.constant 0 : index
      %c0_101 = arith.constant 0 : index
      %c0_102 = arith.constant 0 : index
      %176 = vector.load %arg11[%c0_100, %c0_101, %c0_102] : memref<1x32x32xbf16, #tpu.memory_space<vmem>>, vector<1x32x32xbf16>
      %177 = vector.shape_cast %176 : vector<1x32x32xbf16> to vector<32x32xbf16>
      %cst_103 = arith.constant dense<0.000000e+00> : vector<8x32xf32>
      %178 = tpu.matmul %168, %177, %cst_103 {dimension_numbers = #tpu.dot_dimension_numbers<[1], [0], [0], [1], [0, 0, 1, 1], [], []>} : vector<8x32xbf16>, vector<32x32xbf16>, vector<8x32xf32> -> vector<8x32xf32>
      %c0_104 = arith.constant 0 : index
      %c0_105 = arith.constant 0 : index
      %c0_106 = arith.constant 0 : index
      %179 = vector.load %arg12[%c0_104, %c0_105, %c0_106] : memref<1x1x32xf32, #tpu.memory_space<vmem>>, vector<1x1x32xf32>
      %180 = vector.shape_cast %179 : vector<1x1x32xf32> to vector<1x32xf32>
      %181 = vector.broadcast %180 : vector<1x32xf32> to vector<8x32xf32>
      %182 = arith.addf %178, %181 : vector<8x32xf32>
      %183 = arith.truncf %175 : vector<8x32xf32> to vector<8x32xbf16>
      %c0_107 = arith.constant 0 : index
      %c0_108 = arith.constant 0 : index
      %184 = vector.load %arg15[%c0_107, %c0_108] : memref<8x32xbf16, #tpu.memory_space<vmem>>, vector<8x32xbf16>
      tpu.vector_store %arg15[%c0_107, %c0_108], %183 {strides = array<i32>} : memref<8x32xbf16, #tpu.memory_space<vmem>>, vector<8x32xbf16>,
      %185 = arith.truncf %182 : vector<8x32xf32> to vector<8x32xbf16>
      %c0_109 = arith.constant 0 : index
      %c0_110 = arith.constant 0 : index
      %186 = vector.load %arg16[%c0_109, %c0_110] : memref<8x32xbf16, #tpu.memory_space<vmem>>, vector<8x32xbf16>
      tpu.vector_store %arg16[%c0_109, %c0_110], %185 {strides = array<i32>} : memref<8x32xbf16, #tpu.memory_space<vmem>>, vector<8x32xbf16>,
    } else {
    }
    %c0 = arith.constant 0 : index
    %c0_1 = arith.constant 0 : index
    %c0_2 = arith.constant 0 : index
    %3 = vector.load %arg3[%c0, %c0_1, %c0_2] : memref<1x8x32xbf16, #tpu.memory_space<vmem>>, vector<1x8x32xbf16>
    %4 = vector.shape_cast %3 : vector<1x8x32xbf16> to vector<8x32xbf16>
    %c0_3 = arith.constant 0 : index
    %c0_4 = arith.constant 0 : index
    %c0_5 = arith.constant 0 : index
    %5 = vector.load %arg7[%c0_3, %c0_4, %c0_5] : memref<1x32x32xbf16, #tpu.memory_space<vmem>>, vector<1x32x32xbf16>
    %6 = vector.shape_cast %5 : vector<1x32x32xbf16> to vector<32x32xbf16>
    %cst = arith.constant dense<0.000000e+00> : vector<8x32xf32>
    %7 = tpu.matmul %4, %6, %cst {dimension_numbers = #tpu.dot_dimension_numbers<[1], [0], [0], [1], [0, 0, 1, 1], [], []>} : vector<8x32xbf16>, vector<32x32xbf16>, vector<8x32xf32> -> vector<8x32xf32>
    %c0_6 = arith.constant 0 : index
    %c0_7 = arith.constant 0 : index
    %c0_8 = arith.constant 0 : index
    %8 = vector.load %arg8[%c0_6, %c0_7, %c0_8] : memref<1x1x32xf32, #tpu.memory_space<vmem>>, vector<1x1x32xf32>
    %9 = vector.shape_cast %8 : vector<1x1x32xf32> to vector<1x32xf32>
    %10 = vector.broadcast %9 : vector<1x32xf32> to vector<8x32xf32>
    %11 = arith.addf %7, %10 : vector<8x32xf32>
    %12 = arith.truncf %11 : vector<8x32xf32> to vector<8x32xbf16>
    %c0_9 = arith.constant 0 : index
    %c0_10 = arith.constant 0 : index
    %c0_11 = arith.constant 0 : index
    %13 = vector.load %arg5[%c0_9, %c0_10, %c0_11] : memref<1x1x8xf32, #tpu.memory_space<vmem>>, vector<1x1x8xf32>
    %14 = vector.shape_cast %13 : vector<1x1x8xf32> to vector<1x8xf32>
    %cst_12 = arith.constant 0.000000e+00 : f32
    %15 = vector.broadcast %cst_12 : f32 to vector<1x8xf32>
    %16 = arith.cmpf ogt, %14, %15 : vector<1x8xf32>
    %c0_13 = arith.constant 0 : index
    %c0_14 = arith.constant 0 : index
    %c0_15 = arith.constant 0 : index
    %17 = vector.load %arg6[%c0_13, %c0_14, %c0_15] : memref<1x8x1xf32, #tpu.memory_space<vmem>>, vector<1x8x1xf32>
    %18 = vector.shape_cast %17 : vector<1x8x1xf32> to vector<8x1xf32>
    %19 = vector.extract_strided_slice %12 {offsets = [0, 0], sizes = [8, 8], strides = [1, 1]} : vector<8x32xbf16> to vector<8x8xbf16>
    %c0_16 = arith.constant 0 : index
    %c0_17 = arith.constant 0 : index
    %20 = vector.load %arg15[%c0_16, %c0_17] : memref<8x32xbf16, #tpu.memory_space<vmem>>, vector<8x8xbf16>
    %cst_18 = arith.constant dense<0.000000e+00> : vector<8x8xf32>
    %21 = tpu.matmul %19, %20, %cst_18 {dimension_numbers = #tpu.dot_dimension_numbers<[1], [1], [0], [0], [0, 0, 1, 0], [], []>} : vector<8x8xbf16>, vector<8x8xbf16>, vector<8x8xf32> -> vector<8x8xf32>
    %cst_19 = arith.constant 0xFF800000 : f32
    %22 = vector.shape_cast %16 : vector<1x8xi1> to vector<1x8xi1>
    %23 = vector.broadcast %22 : vector<1x8xi1> to vector<8x8xi1>
    %24 = vector.broadcast %cst_19 : f32 to vector<8x8xf32>
    %25 = arith.select %23, %21, %24 : vector<8x8xi1>, vector<8x8xf32>
    %cst_20 = arith.constant dense<0xFF800000> : vector<8xf32>
    %26 = vector.multi_reduction <maximumf>, %25, %cst_20 [1] : vector<8x8xf32> to vector<8xf32>
    %27 = vector.shape_cast %26 : vector<8xf32> to vector<8x1xf32>
    %cst_21 = arith.constant 0xFF800000 : f32
    %28 = vector.broadcast %cst_21 : f32 to vector<8x1xf32>
    %29 = arith.cmpf ogt, %27, %28 : vector<8x1xf32>
    %cst_22 = arith.constant 0.000000e+00 : f32
    %30 = vector.broadcast %cst_22 : f32 to vector<8x1xf32>
    %31 = arith.select %29, %27, %30 : vector<8x1xi1>, vector<8x1xf32>
    %32 = vector.broadcast %31 : vector<8x1xf32> to vector<8x8xf32>
    %33 = arith.subf %25, %32 : vector<8x8xf32>
    %34 = math.exp %33 : vector<8x8xf32>
    %cst_23 = arith.constant dense<0.000000e+00> : vector<8xf32>
    %35 = vector.multi_reduction <add>, %34, %cst_23 [1] : vector<8x8xf32> to vector<8xf32>
    %36 = vector.shape_cast %35 : vector<8xf32> to vector<8x1xf32>
    %cst_24 = arith.constant 0.000000e+00 : f32
    %37 = vector.broadcast %cst_24 : f32 to vector<8x1xf32>
    %38 = arith.cmpf ogt, %36, %37 : vector<8x1xf32>
    %cst_25 = arith.constant 1.000000e+00 : f32
    %39 = vector.broadcast %cst_25 : f32 to vector<8x1xf32>
    %40 = arith.select %38, %36, %39 : vector<8x1xi1>, vector<8x1xf32>
    %41 = tpu.reciprocal %40 {approx = true} : vector<8x1xf32> -> vector<8x1xf32>
    %42 = vector.broadcast %41 : vector<8x1xf32> to vector<8x8xf32>
    %43 = arith.mulf %34, %42 : vector<8x8xf32>
    %44 = vector.broadcast %18 : vector<8x1xf32> to vector<8x8xf32>
    %45 = arith.mulf %43, %44 : vector<8x8xf32>
    %46 = arith.truncf %45 : vector<8x8xf32> to vector<8x8xbf16>
    %c0_26 = arith.constant 0 : index
    %c0_27 = arith.constant 0 : index
    %c0_28 = arith.constant 0 : index
    %c0_29 = arith.constant 0 : index
    %47 = vector.load %arg14[%c0_26, %c0_27, %c0_28, %c0_29] : memref<1x4x8x8xbf16, #tpu.memory_space<vmem>>, vector<1x1x8x8xbf16>
    %48 = vector.shape_cast %47 : vector<1x1x8x8xbf16> to vector<8x8xbf16>
    %49 = vector.shape_cast %46 : vector<8x8xbf16> to vector<1x1x8x8xbf16>
    tpu.vector_store %arg14[%c0_26, %c0_27, %c0_28, %c0_29], %49 {strides = array<i32>} : memref<1x4x8x8xbf16, #tpu.memory_space<vmem>>, vector<1x1x8x8xbf16>,
    %50 = arith.truncf %45 : vector<8x8xf32> to vector<8x8xbf16>
    %c0_30 = arith.constant 0 : index
    %c0_31 = arith.constant 0 : index
    %51 = vector.load %arg16[%c0_30, %c0_31] : memref<8x32xbf16, #tpu.memory_space<vmem>>, vector<8x8xbf16>
    %cst_32 = arith.constant dense<0.000000e+00> : vector<8x8xf32>
    %52 = tpu.matmul %50, %51, %cst_32 {dimension_numbers = #tpu.dot_dimension_numbers<[1], [0], [0], [1], [0, 0, 1, 1], [], []>} : vector<8x8xbf16>, vector<8x8xbf16>, vector<8x8xf32> -> vector<8x8xf32>
    %c0_33 = arith.constant 0 : index
    %c0_34 = arith.constant 0 : index
    %c0_35 = arith.constant 0 : index
    %53 = vector.load %arg13[%c0_33, %c0_34, %c0_35] : memref<1x8x32xf32, #tpu.memory_space<vmem>>, vector<1x8x8xf32>
    %54 = vector.shape_cast %53 : vector<1x8x8xf32> to vector<8x8xf32>
    %55 = vector.shape_cast %52 : vector<8x8xf32> to vector<1x8x8xf32>
    tpu.vector_store %arg13[%c0_33, %c0_34, %c0_35], %55 {strides = array<i32>} : memref<1x8x32xf32, #tpu.memory_space<vmem>>, vector<1x8x8xf32>,
    %56 = vector.extract_strided_slice %12 {offsets = [0, 8], sizes = [8, 8], strides = [1, 1]} : vector<8x32xbf16> to vector<8x8xbf16>
    %c0_36 = arith.constant 0 : index
    %c8 = arith.constant 8 : index
    %57 = vector.load %arg15[%c0_36, %c8] : memref<8x32xbf16, #tpu.memory_space<vmem>>, vector<8x8xbf16>
    %cst_37 = arith.constant dense<0.000000e+00> : vector<8x8xf32>
    %58 = tpu.matmul %56, %57, %cst_37 {dimension_numbers = #tpu.dot_dimension_numbers<[1], [1], [0], [0], [0, 0, 1, 0], [], []>} : vector<8x8xbf16>, vector<8x8xbf16>, vector<8x8xf32> -> vector<8x8xf32>
    %cst_38 = arith.constant 0xFF800000 : f32
    %59 = vector.shape_cast %16 : vector<1x8xi1> to vector<1x8xi1>
    %60 = vector.broadcast %59 : vector<1x8xi1> to vector<8x8xi1>
    %61 = vector.broadcast %cst_38 : f32 to vector<8x8xf32>
    %62 = arith.select %60, %58, %61 : vector<8x8xi1>, vector<8x8xf32>
    %cst_39 = arith.constant dense<0xFF800000> : vector<8xf32>
    %63 = vector.multi_reduction <maximumf>, %62, %cst_39 [1] : vector<8x8xf32> to vector<8xf32>
    %64 = vector.shape_cast %63 : vector<8xf32> to vector<8x1xf32>
    %cst_40 = arith.constant 0xFF800000 : f32
    %65 = vector.broadcast %cst_40 : f32 to vector<8x1xf32>
    %66 = arith.cmpf ogt, %64, %65 : vector<8x1xf32>
    %cst_41 = arith.constant 0.000000e+00 : f32
    %67 = vector.broadcast %cst_41 : f32 to vector<8x1xf32>
    %68 = arith.select %66, %64, %67 : vector<8x1xi1>, vector<8x1xf32>
    %69 = vector.broadcast %68 : vector<8x1xf32> to vector<8x8xf32>
    %70 = arith.subf %62, %69 : vector<8x8xf32>
    %71 = math.exp %70 : vector<8x8xf32>
    %cst_42 = arith.constant dense<0.000000e+00> : vector<8xf32>
    %72 = vector.multi_reduction <add>, %71, %cst_42 [1] : vector<8x8xf32> to vector<8xf32>
    %73 = vector.shape_cast %72 : vector<8xf32> to vector<8x1xf32>
    %cst_43 = arith.constant 0.000000e+00 : f32
    %74 = vector.broadcast %cst_43 : f32 to vector<8x1xf32>
    %75 = arith.cmpf ogt, %73, %74 : vector<8x1xf32>
    %cst_44 = arith.constant 1.000000e+00 : f32
    %76 = vector.broadcast %cst_44 : f32 to vector<8x1xf32>
    %77 = arith.select %75, %73, %76 : vector<8x1xi1>, vector<8x1xf32>
    %78 = tpu.reciprocal %77 {approx = true} : vector<8x1xf32> -> vector<8x1xf32>
    %79 = vector.broadcast %78 : vector<8x1xf32> to vector<8x8xf32>
    %80 = arith.mulf %71, %79 : vector<8x8xf32>
    %81 = vector.broadcast %18 : vector<8x1xf32> to vector<8x8xf32>
    %82 = arith.mulf %80, %81 : vector<8x8xf32>
    %83 = arith.truncf %82 : vector<8x8xf32> to vector<8x8xbf16>
    %c0_45 = arith.constant 0 : index
    %c1 = arith.constant 1 : index
    %c0_46 = arith.constant 0 : index
    %c0_47 = arith.constant 0 : index
    %84 = vector.load %arg14[%c0_45, %c1, %c0_46, %c0_47] : memref<1x4x8x8xbf16, #tpu.memory_space<vmem>>, vector<1x1x8x8xbf16>
    %85 = vector.shape_cast %84 : vector<1x1x8x8xbf16> to vector<8x8xbf16>
    %86 = vector.shape_cast %83 : vector<8x8xbf16> to vector<1x1x8x8xbf16>
    tpu.vector_store %arg14[%c0_45, %c1, %c0_46, %c0_47], %86 {strides = array<i32>} : memref<1x4x8x8xbf16, #tpu.memory_space<vmem>>, vector<1x1x8x8xbf16>,
    %87 = arith.truncf %82 : vector<8x8xf32> to vector<8x8xbf16>
    %c0_48 = arith.constant 0 : index
    %c8_49 = arith.constant 8 : index
    %88 = vector.load %arg16[%c0_48, %c8_49] : memref<8x32xbf16, #tpu.memory_space<vmem>>, vector<8x8xbf16>
    %cst_50 = arith.constant dense<0.000000e+00> : vector<8x8xf32>
    %89 = tpu.matmul %87, %88, %cst_50 {dimension_numbers = #tpu.dot_dimension_numbers<[1], [0], [0], [1], [0, 0, 1, 1], [], []>} : vector<8x8xbf16>, vector<8x8xbf16>, vector<8x8xf32> -> vector<8x8xf32>
    %c0_51 = arith.constant 0 : index
    %c0_52 = arith.constant 0 : index
    %c8_53 = arith.constant 8 : index
    %90 = vector.load %arg13[%c0_51, %c0_52, %c8_53] : memref<1x8x32xf32, #tpu.memory_space<vmem>>, vector<1x8x8xf32>
    %91 = vector.shape_cast %90 : vector<1x8x8xf32> to vector<8x8xf32>
    %92 = vector.shape_cast %89 : vector<8x8xf32> to vector<1x8x8xf32>
    tpu.vector_store %arg13[%c0_51, %c0_52, %c8_53], %92 {strides = array<i32>} : memref<1x8x32xf32, #tpu.memory_space<vmem>>, vector<1x8x8xf32>,
    %93 = vector.extract_strided_slice %12 {offsets = [0, 16], sizes = [8, 8], strides = [1, 1]} : vector<8x32xbf16> to vector<8x8xbf16>
    %c0_54 = arith.constant 0 : index
    %c16 = arith.constant 16 : index
    %94 = vector.load %arg15[%c0_54, %c16] : memref<8x32xbf16, #tpu.memory_space<vmem>>, vector<8x8xbf16>
    %cst_55 = arith.constant dense<0.000000e+00> : vector<8x8xf32>
    %95 = tpu.matmul %93, %94, %cst_55 {dimension_numbers = #tpu.dot_dimension_numbers<[1], [1], [0], [0], [0, 0, 1, 0], [], []>} : vector<8x8xbf16>, vector<8x8xbf16>, vector<8x8xf32> -> vector<8x8xf32>
    %cst_56 = arith.constant 0xFF800000 : f32
    %96 = vector.shape_cast %16 : vector<1x8xi1> to vector<1x8xi1>
    %97 = vector.broadcast %96 : vector<1x8xi1> to vector<8x8xi1>
    %98 = vector.broadcast %cst_56 : f32 to vector<8x8xf32>
    %99 = arith.select %97, %95, %98 : vector<8x8xi1>, vector<8x8xf32>
    %cst_57 = arith.constant dense<0xFF800000> : vector<8xf32>
    %100 = vector.multi_reduction <maximumf>, %99, %cst_57 [1] : vector<8x8xf32> to vector<8xf32>
    %101 = vector.shape_cast %100 : vector<8xf32> to vector<8x1xf32>
    %cst_58 = arith.constant 0xFF800000 : f32
    %102 = vector.broadcast %cst_58 : f32 to vector<8x1xf32>
    %103 = arith.cmpf ogt, %101, %102 : vector<8x1xf32>
    %cst_59 = arith.constant 0.000000e+00 : f32
    %104 = vector.broadcast %cst_59 : f32 to vector<8x1xf32>
    %105 = arith.select %103, %101, %104 : vector<8x1xi1>, vector<8x1xf32>
    %106 = vector.broadcast %105 : vector<8x1xf32> to vector<8x8xf32>
    %107 = arith.subf %99, %106 : vector<8x8xf32>
    %108 = math.exp %107 : vector<8x8xf32>
    %cst_60 = arith.constant dense<0.000000e+00> : vector<8xf32>
    %109 = vector.multi_reduction <add>, %108, %cst_60 [1] : vector<8x8xf32> to vector<8xf32>
    %110 = vector.shape_cast %109 : vector<8xf32> to vector<8x1xf32>
    %cst_61 = arith.constant 0.000000e+00 : f32
    %111 = vector.broadcast %cst_61 : f32 to vector<8x1xf32>
    %112 = arith.cmpf ogt, %110, %111 : vector<8x1xf32>
    %cst_62 = arith.constant 1.000000e+00 : f32
    %113 = vector.broadcast %cst_62 : f32 to vector<8x1xf32>
    %114 = arith.select %112, %110, %113 : vector<8x1xi1>, vector<8x1xf32>
    %115 = tpu.reciprocal %114 {approx = true} : vector<8x1xf32> -> vector<8x1xf32>
    %116 = vector.broadcast %115 : vector<8x1xf32> to vector<8x8xf32>
    %117 = arith.mulf %108, %116 : vector<8x8xf32>
    %118 = vector.broadcast %18 : vector<8x1xf32> to vector<8x8xf32>
    %119 = arith.mulf %117, %118 : vector<8x8xf32>
    %120 = arith.truncf %119 : vector<8x8xf32> to vector<8x8xbf16>
    %c0_63 = arith.constant 0 : index
    %c2 = arith.constant 2 : index
    %c0_64 = arith.constant 0 : index
    %c0_65 = arith.constant 0 : index
    %121 = vector.load %arg14[%c0_63, %c2, %c0_64, %c0_65] : memref<1x4x8x8xbf16, #tpu.memory_space<vmem>>, vector<1x1x8x8xbf16>
    %122 = vector.shape_cast %121 : vector<1x1x8x8xbf16> to vector<8x8xbf16>
    %123 = vector.shape_cast %120 : vector<8x8xbf16> to vector<1x1x8x8xbf16>
    tpu.vector_store %arg14[%c0_63, %c2, %c0_64, %c0_65], %123 {strides = array<i32>} : memref<1x4x8x8xbf16, #tpu.memory_space<vmem>>, vector<1x1x8x8xbf16>,
    %124 = arith.truncf %119 : vector<8x8xf32> to vector<8x8xbf16>
    %c0_66 = arith.constant 0 : index
    %c16_67 = arith.constant 16 : index
    %125 = vector.load %arg16[%c0_66, %c16_67] : memref<8x32xbf16, #tpu.memory_space<vmem>>, vector<8x8xbf16>
    %cst_68 = arith.constant dense<0.000000e+00> : vector<8x8xf32>
    %126 = tpu.matmul %124, %125, %cst_68 {dimension_numbers = #tpu.dot_dimension_numbers<[1], [0], [0], [1], [0, 0, 1, 1], [], []>} : vector<8x8xbf16>, vector<8x8xbf16>, vector<8x8xf32> -> vector<8x8xf32>
    %c0_69 = arith.constant 0 : index
    %c0_70 = arith.constant 0 : index
    %c16_71 = arith.constant 16 : index
    %127 = vector.load %arg13[%c0_69, %c0_70, %c16_71] : memref<1x8x32xf32, #tpu.memory_space<vmem>>, vector<1x8x8xf32>
    %128 = vector.shape_cast %127 : vector<1x8x8xf32> to vector<8x8xf32>
    %129 = vector.shape_cast %126 : vector<8x8xf32> to vector<1x8x8xf32>
    tpu.vector_store %arg13[%c0_69, %c0_70, %c16_71], %129 {strides = array<i32>} : memref<1x8x32xf32, #tpu.memory_space<vmem>>, vector<1x8x8xf32>,
    %130 = vector.extract_strided_slice %12 {offsets = [0, 24], sizes = [8, 8], strides = [1, 1]} : vector<8x32xbf16> to vector<8x8xbf16>
    %c0_72 = arith.constant 0 : index
    %c24 = arith.constant 24 : index
    %131 = vector.load %arg15[%c0_72, %c24] : memref<8x32xbf16, #tpu.memory_space<vmem>>, vector<8x8xbf16>
    %cst_73 = arith.constant dense<0.000000e+00> : vector<8x8xf32>
    %132 = tpu.matmul %130, %131, %cst_73 {dimension_numbers = #tpu.dot_dimension_numbers<[1], [1], [0], [0], [0, 0, 1, 0], [], []>} : vector<8x8xbf16>, vector<8x8xbf16>, vector<8x8xf32> -> vector<8x8xf32>
    %cst_74 = arith.constant 0xFF800000 : f32
    %133 = vector.shape_cast %16 : vector<1x8xi1> to vector<1x8xi1>
    %134 = vector.broadcast %133 : vector<1x8xi1> to vector<8x8xi1>
    %135 = vector.broadcast %cst_74 : f32 to vector<8x8xf32>
    %136 = arith.select %134, %132, %135 : vector<8x8xi1>, vector<8x8xf32>
    %cst_75 = arith.constant dense<0xFF800000> : vector<8xf32>
    %137 = vector.multi_reduction <maximumf>, %136, %cst_75 [1] : vector<8x8xf32> to vector<8xf32>
    %138 = vector.shape_cast %137 : vector<8xf32> to vector<8x1xf32>
    %cst_76 = arith.constant 0xFF800000 : f32
    %139 = vector.broadcast %cst_76 : f32 to vector<8x1xf32>
    %140 = arith.cmpf ogt, %138, %139 : vector<8x1xf32>
    %cst_77 = arith.constant 0.000000e+00 : f32
    %141 = vector.broadcast %cst_77 : f32 to vector<8x1xf32>
    %142 = arith.select %140, %138, %141 : vector<8x1xi1>, vector<8x1xf32>
    %143 = vector.broadcast %142 : vector<8x1xf32> to vector<8x8xf32>
    %144 = arith.subf %136, %143 : vector<8x8xf32>
    %145 = math.exp %144 : vector<8x8xf32>
    %cst_78 = arith.constant dense<0.000000e+00> : vector<8xf32>
    %146 = vector.multi_reduction <add>, %145, %cst_78 [1] : vector<8x8xf32> to vector<8xf32>
    %147 = vector.shape_cast %146 : vector<8xf32> to vector<8x1xf32>
    %cst_79 = arith.constant 0.000000e+00 : f32
    %148 = vector.broadcast %cst_79 : f32 to vector<8x1xf32>
    %149 = arith.cmpf ogt, %147, %148 : vector<8x1xf32>
    %cst_80 = arith.constant 1.000000e+00 : f32
    %150 = vector.broadcast %cst_80 : f32 to vector<8x1xf32>
    %151 = arith.select %149, %147, %150 : vector<8x1xi1>, vector<8x1xf32>
    %152 = tpu.reciprocal %151 {approx = true} : vector<8x1xf32> -> vector<8x1xf32>
    %153 = vector.broadcast %152 : vector<8x1xf32> to vector<8x8xf32>
    %154 = arith.mulf %145, %153 : vector<8x8xf32>
    %155 = vector.broadcast %18 : vector<8x1xf32> to vector<8x8xf32>
    %156 = arith.mulf %154, %155 : vector<8x8xf32>
    %157 = arith.truncf %156 : vector<8x8xf32> to vector<8x8xbf16>
    %c0_81 = arith.constant 0 : index
    %c3 = arith.constant 3 : index
    %c0_82 = arith.constant 0 : index
    %c0_83 = arith.constant 0 : index
    %158 = vector.load %arg14[%c0_81, %c3, %c0_82, %c0_83] : memref<1x4x8x8xbf16, #tpu.memory_space<vmem>>, vector<1x1x8x8xbf16>
    %159 = vector.shape_cast %158 : vector<1x1x8x8xbf16> to vector<8x8xbf16>
    %160 = vector.shape_cast %157 : vector<8x8xbf16> to vector<1x1x8x8xbf16>
    tpu.vector_store %arg14[%c0_81, %c3, %c0_82, %c0_83], %160 {strides = array<i32>} : memref<1x4x8x8xbf16, #tpu.memory_space<vmem>>, vector<1x1x8x8xbf16>,
    %161 = arith.truncf %156 : vector<8x8xf32> to vector<8x8xbf16>
    %c0_84 = arith.constant 0 : index
    %c24_85 = arith.constant 24 : index
    %162 = vector.load %arg16[%c0_84, %c24_85] : memref<8x32xbf16, #tpu.memory_space<vmem>>, vector<8x8xbf16>
    %cst_86 = arith.constant dense<0.000000e+00> : vector<8x8xf32>
    %163 = tpu.matmul %161, %162, %cst_86 {dimension_numbers = #tpu.dot_dimension_numbers<[1], [0], [0], [1], [0, 0, 1, 1], [], []>} : vector<8x8xbf16>, vector<8x8xbf16>, vector<8x8xf32> -> vector<8x8xf32>
    %c0_87 = arith.constant 0 : index
    %c0_88 = arith.constant 0 : index
    %c24_89 = arith.constant 24 : index
    %164 = vector.load %arg13[%c0_87, %c0_88, %c24_89] : memref<1x8x32xf32, #tpu.memory_space<vmem>>, vector<1x8x8xf32>
    %165 = vector.shape_cast %164 : vector<1x8x8xf32> to vector<8x8xf32>
    %166 = vector.shape_cast %163 : vector<8x8xf32> to vector<1x8x8xf32>
    tpu.vector_store %arg13[%c0_87, %c0_88, %c24_89], %166 {strides = array<i32>} : memref<1x8x32xf32, #tpu.memory_space<vmem>>, vector<1x8x8xf32>,
    return
  }
  func.func @transform_0(%arg0: i32, %arg1: i32, %arg2: i32) -> (i32, i32, i32) {
    %c0_i32 = arith.constant 0 : i32
    %c0_i32_0 = arith.constant 0 : i32
    return %arg0, %arg2, %c0_i32 : i32, i32, i32
  }
  func.func @transform_1(%arg0: i32, %arg1: i32, %arg2: i32) -> (i32, i32, i32) {
    %c0_i32 = arith.constant 0 : i32
    %c0_i32_0 = arith.constant 0 : i32
    %c0_i32_1 = arith.constant 0 : i32
    return %arg0, %c0_i32, %c0_i32_0 : i32, i32, i32
  }
  func.func @transform_2(%arg0: i32, %arg1: i32, %arg2: i32) -> (i32, i32, i32) {
    %c0_i32 = arith.constant 0 : i32
    %c0_i32_0 = arith.constant 0 : i32
    %c0_i32_1 = arith.constant 0 : i32
    return %arg0, %c0_i32, %c0_i32_0 : i32, i32, i32
  }
  func.func @transform_3(%arg0: i32, %arg1: i32, %arg2: i32) -> (i32, i32, i32) {
    %c0_i32 = arith.constant 0 : i32
    %c0_i32_0 = arith.constant 0 : i32
    return %arg0, %arg2, %c0_i32 : i32, i32, i32
  }
  func.func @transform_4(%arg0: i32, %arg1: i32, %arg2: i32) -> (i32, i32, i32) {
    %c0_i32 = arith.constant 0 : i32
    %c0_i32_0 = arith.constant 0 : i32
    %c0_i32_1 = arith.constant 0 : i32
    return %arg1, %c0_i32, %c0_i32_0 : i32, i32, i32
  }
  func.func @transform_5(%arg0: i32, %arg1: i32, %arg2: i32) -> (i32, i32, i32) {
    %c0_i32 = arith.constant 0 : i32
    %c0_i32_0 = arith.constant 0 : i32
    %c0_i32_1 = arith.constant 0 : i32
    return %arg1, %c0_i32, %c0_i32_0 : i32, i32, i32
  }
  func.func @transform_6(%arg0: i32, %arg1: i32, %arg2: i32) -> (i32, i32, i32) {
    %c0_i32 = arith.constant 0 : i32
    %c0_i32_0 = arith.constant 0 : i32
    %c0_i32_1 = arith.constant 0 : i32
    return %arg1, %c0_i32, %c0_i32_0 : i32, i32, i32
  }
  func.func @transform_7(%arg0: i32, %arg1: i32, %arg2: i32) -> (i32, i32, i32) {
    %c0_i32 = arith.constant 0 : i32
    %c0_i32_0 = arith.constant 0 : i32
    %c0_i32_1 = arith.constant 0 : i32
    return %arg1, %c0_i32, %c0_i32_0 : i32, i32, i32
  }
  func.func @transform_8(%arg0: i32, %arg1: i32, %arg2: i32) -> (i32, i32, i32) {
    %c0_i32 = arith.constant 0 : i32
    %c0_i32_0 = arith.constant 0 : i32
    %c0_i32_1 = arith.constant 0 : i32
    return %arg1, %c0_i32, %c0_i32_0 : i32, i32, i32
  }
  func.func @transform_9(%arg0: i32, %arg1: i32, %arg2: i32) -> (i32, i32, i32) {
    %c0_i32 = arith.constant 0 : i32
    %c0_i32_0 = arith.constant 0 : i32
    %c0_i32_1 = arith.constant 0 : i32
    return %arg1, %c0_i32, %c0_i32_0 : i32, i32, i32
  }
  func.func @transform_10(%arg0: i32, %arg1: i32, %arg2: i32) -> (i32, i32, i32) {
    %c0_i32 = arith.constant 0 : i32
    return %arg0, %arg2, %arg1 : i32, i32, i32
  }
  func.func @transform_11(%arg0: i32, %arg1: i32, %arg2: i32) -> (i32, i32, i32, i32) {
    %c0_i32 = arith.constant 0 : i32
    %c0_i32_0 = arith.constant 0 : i32
    return %arg0, %arg1, %arg2, %c0_i32 : i32, i32, i32, i32
  }
}

</mosaic_0001>

<llo_original>
// kernel: tpu_custom_call.1
$region0: #{tpu_custom_call.1}
  #allocation0 [shape = 'u32[]', space=smem, size = 0x4, offset = 0x4, fixed_abs, tag = 'smem constant byte address 0x4 - core index']
  #allocation1 [shape = 'u32[72,128]{1,0:T(1,128)}', space=vmem, size = 0x9000, scoped, tag = 'internal scratch']
  #allocation2 [shape = 'bf16[8,32]{1,0:T(8,128)(2,1)}', space=vmem, size = 0x800, scoped, tag = 'scratch operand']
  #allocation3 [shape = 'bf16[8,32]{1,0:T(8,128)(2,1)}', space=vmem, size = 0x800, scoped, tag = 'scratch operand']
  %s0 = inlined_call_operand.hbm [shape: bf16[2,8,32], index: 0, kind: input, shape index: {}]
  %s1 = inlined_call_operand.hbm [shape: bf16[2,8,32], index: 1, kind: input, shape index: {}]
  %s2 = inlined_call_operand.vmem [shape: f32[2,1,8], index: 2, kind: input, shape index: {}]
  %s3 = inlined_call_operand.vmem [shape: f32[2,8,1], index: 3, kind: input, shape index: {}]
  %s4 = inlined_call_operand.vmem [shape: bf16[1,32,32], index: 4, kind: input, shape index: {}]
  %s5 = inlined_call_operand.vmem [shape: f32[1,1,32], index: 5, kind: input, shape index: {}]
  %s6 = inlined_call_operand.hbm [shape: bf16[1,32,32], index: 6, kind: input, shape index: {}]
  %s7 = inlined_call_operand.vmem [shape: f32[1,1,32], index: 7, kind: input, shape index: {}]
  %s8 = inlined_call_operand.hbm [shape: bf16[1,32,32], index: 8, kind: input, shape index: {}]
  %s9 = inlined_call_operand.vmem [shape: f32[1,1,32], index: 9, kind: input, shape index: {}]
  %s10 = inlined_call_operand.hbm [shape: f32[2,8,32], index: 10, kind: output, shape index: {0}]
  %s11 = inlined_call_operand.hbm [shape: bf16[2,4,8,8], index: 11, kind: output, shape index: {1}]
  %12 = xla_tuple %s10, %s11
  %s13 = sld [smem:[#allocation0]]
  $region101: #{tpu_custom_call.1} parent=0
    _
  %s15 = ssub.s32 1, %s13
  %s16 = scalar_select 0, %s15, %s13
  $region1: #{tpu_custom_call.1} parent=0
    #allocation4 [shape = 'u8[4096]{0}', space=vmem, size = 0x1000, scoped, tag = 'input window, operand 0']
    #allocation5 [shape = 's32[2]{0}', space=sflag, size = 0x8, scoped, tag = 'scoped memory for tpu_custom_call.1']
    #allocation6 [shape = 's32[2]{0}', space=sflag, size = 0x8, scoped, tag = 'scoped memory for tpu_custom_call.1']
    #allocation7 [shape = 'u8[4096]{0}', space=vmem, size = 0x1000, scoped, tag = 'input window, operand 1']
    #allocation8 [shape = 's32[2]{0}', space=sflag, size = 0x8, scoped, tag = 'scoped memory for tpu_custom_call.1']
    #allocation9 [shape = 'u8[8192]{0}', space=vmem, size = 0x2000, scoped, tag = 'input window, operand 6, single buffered']
    #allocation10 [shape = 'u8[8192]{0}', space=vmem, size = 0x2000, scoped, tag = 'input window, operand 8, single buffered']
    #allocation11 [shape = 's32[1]{0}', space=sflag, size = 0x4, scoped, tag = 'scoped memory for tpu_custom_call.1']
    #allocation12 [shape = 'u8[8192]{0}', space=vmem, size = 0x2000, scoped, tag = 'output window, operand 0']
    #allocation13 [shape = 'u8[16384]{0}', space=vmem, size = 0x4000, scoped, tag = 'output window, operand 1']
    #allocation14 [shape = 's32[2]{0}', space=sflag, size = 0x8, scoped, tag = 'scoped memory for tpu_custom_call.1']
    %17 = vsyncpa [#allocation5], 0
    %s18 = scalar_lea.sflag [#allocation5], 1
    %19 = vsyncpa %s18, 0
    %20 = vsyncpa [#allocation8], 0
    %s21 = scalar_lea.sflag [#allocation8], 1
    %22 = vsyncpa %s21, 0
    %23 = vsyncpa [#allocation11], 0
    %24 = vsyncpa [#allocation6], 0
    %s25 = scalar_lea.sflag [#allocation6], 1
    %26 = vsyncpa %s25, 0
    %27 = vsyncpa [#allocation14], 0
    %s28 = scalar_lea.sflag [#allocation14], 1
    %29 = vsyncpa %s28, 0
    loop: start=0, step=1, limit=4
    $region2: #{tpu_custom_call.1} parent=1 // loop_pre_header
      _
    $region3: #{tpu_custom_call.1} parent=1 // loop_header
      %s31 = sphi 0, %s35
      %p32 = scmp.ge.s32.totalorder %s31, 4
      %s38 = sphi 0, %s57
      %s39 = sphi 0, %s53
      %s40 = sphi 0, %s49
      %s41 = sphi 0, %s38
      %s42 = sphi 0, %s39
      %s43 = sphi 0, %s40
      %s44 = sphi 0, %s41
      %s45 = sphi 0, %s42
      %s46 = sphi 0, %s43
      %s62 = sphi 0, %s64
      %s65 = sphi 0, %s62
      %s66 = sphi 0, %s65
      %s82 = sphi 0, %s66
      %s88 = sphi 0, %s90
      %s91 = sphi 0, %s88
      %s92 = sphi 0, %s91
      %s108 = sphi 0, %s92
      %s114 = sphi 0, %s116
      %s117 = sphi 0, %s114
      %s118 = sphi 0, %s117
      %s134 = sphi 0, %s118
      %s142 = sphi 0, %s144
      %s145 = sphi 0, %s142
      %s146 = sphi 0, %s145
      %s162 = sphi 0, %s146
      %s168 = sphi 0, %s170
      %s171 = sphi 0, %s168
      %s172 = sphi 0, %s171
      %s188 = sphi 0, %s172
      %s194 = sphi 0, %s196
      %s197 = sphi 0, %s194
      %s198 = sphi 0, %s197
      %s214 = sphi 0, %s198
      %s220 = sphi 0, %s222
      %s223 = sphi 0, %s220
      %s224 = sphi 0, %s223
      %s240 = sphi 0, %s224
      %s246 = sphi 0, %s248
      %s249 = sphi 0, %s246
      %s250 = sphi 0, %s249
      %s266 = sphi 0, %s250
      %s272 = sphi 0, %s274
      %s275 = sphi 0, %s272
      %s276 = sphi 0, %s275
      %s292 = sphi 0, %s276
      %s298 = sphi 0, %s300
      %s301 = sphi 0, %s298
      %s302 = sphi 0, %s301
      %s318 = sphi 0, %s302
      %s328 = sphi 0, %s330
      %s331 = sphi 0, %s328
      %s332 = sphi 0, %s331
      %s348 = sphi 0, %s332
      %s358 = sphi 0, %s360
      %s361 = sphi 0, %s358
      %s362 = sphi 0, %s361
      %s378 = sphi 0, %s362
    $region4: #{tpu_custom_call.1} parent=1 // loop_header_branch
      %34 = sbr.rel (%p32) target = $region8
    $region5: #{tpu_custom_call.1} parent=1 // loop_body
      %s36 = ssub.s32 %s31, 1
      %s37 = ssub.s32 %s31, 2
      %s47 = sadd.s32 1, %s40
      %p48 = scmp.ge.s32.totalorder %s47, 1
      %s49 = scalar_select %p48, 0, %s47
      %s50 = sadd.s32 1, %s39
      %s51 = scalar_select %p48, %s50, %s39
      %p52 = scmp.ge.s32.totalorder %s51, 1
      %s53 = scalar_select %p52, 0, %s51
      %s54 = sadd.s32 1, %s38
      %s55 = scalar_select %p52, %s54, %s38
      %p56 = scmp.ge.s32.totalorder %s55, 2
      %s57 = scalar_select %p56, 0, %s55
      %s58 = ssub.s32 %s38, %s57
      %s59 = ssub.s32 %s40, %s49
      %s60 = sor.u32 %s58, %s59
      %p61 = scmp.eq.s32.totalorder %s60, 0
      %s63 = sadd.s32 %s62, 1
      %s64 = scalar_select %p61, %s62, %s63
      %p67 = pneg %p61
      %p68 = scmp.eq.s32.totalorder %s31, 1
      %p69 = por %p67, %p68
      %p70 = scmp.ne.s32.totalorder %s62, %s65
      %p71 = scmp.eq.s32.totalorder %s31, 0
      %p72 = por %p70, %p71
      %p73 = scmp.ne.s32.totalorder %s62, %s65
      %p74 = scmp.eq.s32.totalorder %s36, 1
      %p75 = por %p73, %p74
      %p76 = scmp.ne.s32.totalorder %s65, %s66
      %p77 = scmp.eq.s32.totalorder %s36, 0
      %p78 = por %p76, %p77
      %p79 = scmp.ne.s32.totalorder %s65, %s66
      %p80 = scmp.eq.s32.totalorder %s37, 1
      %p81 = por %p79, %p80
      %p83 = scmp.ne.s32.totalorder %s66, %s82
      %p84 = scmp.eq.s32.totalorder %s37, 0
      %p85 = por %p83, %p84
      %s86 = ssub.s32 %s38, %s57
      %p87 = scmp.eq.s32.totalorder %s86, 0
      %s89 = sadd.s32 %s88, 1
      %s90 = scalar_select %p87, %s88, %s89
      %p93 = pneg %p87
      %p94 = scmp.eq.s32.totalorder %s31, 1
      %p95 = por %p93, %p94
      %p96 = scmp.ne.s32.totalorder %s88, %s91
      %p97 = scmp.eq.s32.totalorder %s31, 0
      %p98 = por %p96, %p97
      %p99 = scmp.ne.s32.totalorder %s88, %s91
      %p100 = scmp.eq.s32.totalorder %s36, 1
      %p101 = por %p99, %p100
      %p102 = scmp.ne.s32.totalorder %s91, %s92
      %p103 = scmp.eq.s32.totalorder %s36, 0
      %p104 = por %p102, %p103
      %p105 = scmp.ne.s32.totalorder %s91, %s92
      %p106 = scmp.eq.s32.totalorder %s37, 1
      %p107 = por %p105, %p106
      %p109 = scmp.ne.s32.totalorder %s92, %s108
      %p110 = scmp.eq.s32.totalorder %s37, 0
      %p111 = por %p109, %p110
      %s112 = ssub.s32 %s38, %s57
      %p113 = scmp.eq.s32.totalorder %s112, 0
      %s115 = sadd.s32 %s114, 1
      %s116 = scalar_select %p113, %s114, %s115
      %p119 = pneg %p113
      %p120 = scmp.eq.s32.totalorder %s31, 1
      %p121 = por %p119, %p120
      %p122 = scmp.ne.s32.totalorder %s114, %s117
      %p123 = scmp.eq.s32.totalorder %s31, 0
      %p124 = por %p122, %p123
      %p125 = scmp.ne.s32.totalorder %s114, %s117
      %p126 = scmp.eq.s32.totalorder %s36, 1
      %p127 = por %p125, %p126
      %p128 = scmp.ne.s32.totalorder %s117, %s118
      %p129 = scmp.eq.s32.totalorder %s36, 0
      %p130 = por %p128, %p129
      %p131 = scmp.ne.s32.totalorder %s117, %s118
      %p132 = scmp.eq.s32.totalorder %s37, 1
      %p133 = por %p131, %p132
      %p135 = scmp.ne.s32.totalorder %s118, %s134
      %p136 = scmp.eq.s32.totalorder %s37, 0
      %p137 = por %p135, %p136
      %s138 = ssub.s32 %s38, %s57
      %s139 = ssub.s32 %s40, %s49
      %s140 = sor.u32 %s138, %s139
      %p141 = scmp.eq.s32.totalorder %s140, 0
      %s143 = sadd.s32 %s142, 1
      %s144 = scalar_select %p141, %s142, %s143
      %p147 = pneg %p141
      %p148 = scmp.eq.s32.totalorder %s31, 1
      %p149 = por %p147, %p148
      %p150 = scmp.ne.s32.totalorder %s142, %s145
      %p151 = scmp.eq.s32.totalorder %s31, 0
      %p152 = por %p150, %p151
      %p153 = scmp.ne.s32.totalorder %s142, %s145
      %p154 = scmp.eq.s32.totalorder %s36, 1
      %p155 = por %p153, %p154
      %p156 = scmp.ne.s32.totalorder %s145, %s146
      %p157 = scmp.eq.s32.totalorder %s36, 0
      %p158 = por %p156, %p157
      %p159 = scmp.ne.s32.totalorder %s145, %s146
      %p160 = scmp.eq.s32.totalorder %s37, 1
      %p161 = por %p159, %p160
      %p163 = scmp.ne.s32.totalorder %s146, %s162
      %p164 = scmp.eq.s32.totalorder %s37, 0
      %p165 = por %p163, %p164
      %s166 = ssub.s32 %s39, %s53
      %p167 = scmp.eq.s32.totalorder %s166, 0
      %s169 = sadd.s32 %s168, 1
      %s170 = scalar_select %p167, %s168, %s169
      %p173 = pneg %p167
      %p174 = scmp.eq.s32.totalorder %s31, 1
      %p175 = por %p173, %p174
      %p176 = scmp.ne.s32.totalorder %s168, %s171
      %p177 = scmp.eq.s32.totalorder %s31, 0
      %p178 = por %p176, %p177
      %p179 = scmp.ne.s32.totalorder %s168, %s171
      %p180 = scmp.eq.s32.totalorder %s36, 1
      %p181 = por %p179, %p180
      %p182 = scmp.ne.s32.totalorder %s171, %s172
      %p183 = scmp.eq.s32.totalorder %s36, 0
      %p184 = por %p182, %p183
      %p185 = scmp.ne.s32.totalorder %s171, %s172
      %p186 = scmp.eq.s32.totalorder %s37, 1
      %p187 = por %p185, %p186
      %p189 = scmp.ne.s32.totalorder %s172, %s188
      %p190 = scmp.eq.s32.totalorder %s37, 0
      %p191 = por %p189, %p190
      %s192 = ssub.s32 %s39, %s53
      %p193 = scmp.eq.s32.totalorder %s192, 0
      %s195 = sadd.s32 %s194, 1
      %s196 = scalar_select %p193, %s194, %s195
      %p199 = pneg %p193
      %p200 = scmp.eq.s32.totalorder %s31, 1
      %p201 = por %p199, %p200
      %p202 = scmp.ne.s32.totalorder %s194, %s197
      %p203 = scmp.eq.s32.totalorder %s31, 0
      %p204 = por %p202, %p203
      %p205 = scmp.ne.s32.totalorder %s194, %s197
      %p206 = scmp.eq.s32.totalorder %s36, 1
      %p207 = por %p205, %p206
      %p208 = scmp.ne.s32.totalorder %s197, %s198
      %p209 = scmp.eq.s32.totalorder %s36, 0
      %p210 = por %p208, %p209
      %p211 = scmp.ne.s32.totalorder %s197, %s198
      %p212 = scmp.eq.s32.totalorder %s37, 1
      %p213 = por %p211, %p212
      %p215 = scmp.ne.s32.totalorder %s198, %s214
      %p216 = scmp.eq.s32.totalorder %s37, 0
      %p217 = por %p215, %p216
      %s218 = ssub.s32 %s39, %s53
      %p219 = scmp.eq.s32.totalorder %s218, 0
      %s221 = sadd.s32 %s220, 1
      %s222 = scalar_select %p219, %s220, %s221
      %p225 = pneg %p219
      %p226 = scmp.eq.s32.totalorder %s31, 1
      %p227 = por %p225, %p226
      %p228 = scmp.ne.s32.totalorder %s220, %s223
      %p229 = scmp.eq.s32.totalorder %s31, 0
      %p230 = por %p228, %p229
      %p231 = scmp.ne.s32.totalorder %s220, %s223
      %p232 = scmp.eq.s32.totalorder %s36, 1
      %p233 = por %p231, %p232
      %p234 = scmp.ne.s32.totalorder %s223, %s224
      %p235 = scmp.eq.s32.totalorder %s36, 0
      %p236 = por %p234, %p235
      %p237 = scmp.ne.s32.totalorder %s223, %s224
      %p238 = scmp.eq.s32.totalorder %s37, 1
      %p239 = por %p237, %p238
      %p241 = scmp.ne.s32.totalorder %s224, %s240
      %p242 = scmp.eq.s32.totalorder %s37, 0
      %p243 = por %p241, %p242
      %s244 = ssub.s32 %s39, %s53
      %p245 = scmp.eq.s32.totalorder %s244, 0
      %s247 = sadd.s32 %s246, 1
      %s248 = scalar_select %p245, %s246, %s247
      %p251 = pneg %p245
      %p252 = scmp.eq.s32.totalorder %s31, 1
      %p253 = por %p251, %p252
      %p254 = scmp.ne.s32.totalorder %s246, %s249
      %p255 = scmp.eq.s32.totalorder %s31, 0
      %p256 = por %p254, %p255
      %p257 = scmp.ne.s32.totalorder %s246, %s249
      %p258 = scmp.eq.s32.totalorder %s36, 1
      %p259 = por %p257, %p258
      %p260 = scmp.ne.s32.totalorder %s249, %s250
      %p261 = scmp.eq.s32.totalorder %s36, 0
      %p262 = por %p260, %p261
      %p263 = scmp.ne.s32.totalorder %s249, %s250
      %p264 = scmp.eq.s32.totalorder %s37, 1
      %p265 = por %p263, %p264
      %p267 = scmp.ne.s32.totalorder %s250, %s266
      %p268 = scmp.eq.s32.totalorder %s37, 0
      %p269 = por %p267, %p268
      %s270 = ssub.s32 %s39, %s53
      %p271 = scmp.eq.s32.totalorder %s270, 0
      %s273 = sadd.s32 %s272, 1
      %s274 = scalar_select %p271, %s272, %s273
      %p277 = pneg %p271
      %p278 = scmp.eq.s32.totalorder %s31, 1
      %p279 = por %p277, %p278
      %p280 = scmp.ne.s32.totalorder %s272, %s275
      %p281 = scmp.eq.s32.totalorder %s31, 0
      %p282 = por %p280, %p281
      %p283 = scmp.ne.s32.totalorder %s272, %s275
      %p284 = scmp.eq.s32.totalorder %s36, 1
      %p285 = por %p283, %p284
      %p286 = scmp.ne.s32.totalorder %s275, %s276
      %p287 = scmp.eq.s32.totalorder %s36, 0
      %p288 = por %p286, %p287
      %p289 = scmp.ne.s32.totalorder %s275, %s276
      %p290 = scmp.eq.s32.totalorder %s37, 1
      %p291 = por %p289, %p290
      %p293 = scmp.ne.s32.totalorder %s276, %s292
      %p294 = scmp.eq.s32.totalorder %s37, 0
      %p295 = por %p293, %p294
      %s296 = ssub.s32 %s39, %s53
      %p297 = scmp.eq.s32.totalorder %s296, 0
      %s299 = sadd.s32 %s298, 1
      %s300 = scalar_select %p297, %s298, %s299
      %p303 = pneg %p297
      %p304 = scmp.eq.s32.totalorder %s31, 1
      %p305 = por %p303, %p304
      %p306 = scmp.ne.s32.totalorder %s298, %s301
      %p307 = scmp.eq.s32.totalorder %s31, 0
      %p308 = por %p306, %p307
      %p309 = scmp.ne.s32.totalorder %s298, %s301
      %p310 = scmp.eq.s32.totalorder %s36, 1
      %p311 = por %p309, %p310
      %p312 = scmp.ne.s32.totalorder %s301, %s302
      %p313 = scmp.eq.s32.totalorder %s36, 0
      %p314 = por %p312, %p313
      %p315 = scmp.ne.s32.totalorder %s301, %s302
      %p316 = scmp.eq.s32.totalorder %s37, 1
      %p317 = por %p315, %p316
      %p319 = scmp.ne.s32.totalorder %s302, %s318
      %p320 = scmp.eq.s32.totalorder %s37, 0
      %p321 = por %p319, %p320
      %s322 = ssub.s32 %s38, %s57
      %s323 = ssub.s32 %s40, %s49
      %s324 = sor.u32 %s322, %s323
      %s325 = ssub.s32 %s39, %s53
      %s326 = sor.u32 %s324, %s325
      %p327 = scmp.eq.s32.totalorder %s326, 0
      %s329 = sadd.s32 %s328, 1
      %s330 = scalar_select %p327, %s328, %s329
      %p333 = pneg %p327
      %p334 = scmp.eq.s32.totalorder %s31, 1
      %p335 = por %p333, %p334
      %p336 = scmp.ne.s32.totalorder %s328, %s331
      %p337 = scmp.eq.s32.totalorder %s31, 0
      %p338 = por %p336, %p337
      %p339 = scmp.ne.s32.totalorder %s328, %s331
      %p340 = scmp.eq.s32.totalorder %s36, 1
      %p341 = por %p339, %p340
      %p342 = scmp.ne.s32.totalorder %s331, %s332
      %p343 = scmp.eq.s32.totalorder %s36, 0
      %p344 = por %p342, %p343
      %p345 = scmp.ne.s32.totalorder %s331, %s332
      %p346 = scmp.eq.s32.totalorder %s37, 1
      %p347 = por %p345, %p346
      %p349 = scmp.ne.s32.totalorder %s332, %s348
      %p350 = scmp.eq.s32.totalorder %s37, 0
      %p351 = por %p349, %p350
      %s352 = ssub.s32 %s38, %s57
      %s353 = ssub.s32 %s39, %s53
      %s354 = sor.u32 %s352, %s353
      %s355 = ssub.s32 %s40, %s49
      %s356 = sor.u32 %s354, %s355
      %p357 = scmp.eq.s32.totalorder %s356, 0
      %s359 = sadd.s32 %s358, 1
      %s360 = scalar_select %p357, %s358, %s359
      %p363 = pneg %p357
      %p364 = scmp.eq.s32.totalorder %s31, 1
      %p365 = por %p363, %p364
      %p366 = scmp.ne.s32.totalorder %s358, %s361
      %p367 = scmp.eq.s32.totalorder %s31, 0
      %p368 = por %p366, %p367
      %p369 = scmp.ne.s32.totalorder %s358, %s361
      %p370 = scmp.eq.s32.totalorder %s36, 1
      %p371 = por %p369, %p370
      %p372 = scmp.ne.s32.totalorder %s361, %s362
      %p373 = scmp.eq.s32.totalorder %s36, 0
      %p374 = por %p372, %p373
      %p375 = scmp.ne.s32.totalorder %s361, %s362
      %p376 = scmp.eq.s32.totalorder %s37, 1
      %p377 = por %p375, %p376
      %p379 = scmp.ne.s32.totalorder %s362, %s378
      %p380 = scmp.eq.s32.totalorder %s37, 0
      %p381 = por %p379, %p380
      %p382 = scmp.le.s32.totalorder 1, %s31
      %p383 = scmp.lt.s32.totalorder %s31, 3
      %p384 = pnand %p382, %p383
      %p385 = pneg %p384
      // Predicated region
      $region9: #{tpu_custom_call.1} parent=5 // pred_check
        _
      $region10: #{tpu_custom_call.1} parent=5 // pred_check_branch
        %387 = sbr.rel (%p384) target = $region12
      $region11: #{tpu_custom_call.1} parent=5 // pred_region
        %s388 = ssub.s32 %s31, 1
        // Predicated region
        $region13: #{tpu_custom_call.1} parent=11 // pred_check
          %p389 = pneg %p184
        $region14: #{tpu_custom_call.1} parent=11 // pred_check_branch
          %391 = sbr.rel (%p389) target = $region16
        $region15: #{tpu_custom_call.1} parent=11 // pred_region
          %p392 = scmp.lt.s32.totalorder %s42, 0
          %s393 = scalar_select %p392, %s42, 0
          %s394 = smul.addr %s393, 4
          %s395 = smul.addr %s394, 4
          %s396 = scalar_lea.vmem %s4, %s395
        $region16: #{tpu_custom_call.1} parent=11 // pred_fallthru
          _
        // Predicated region
        $region17: #{tpu_custom_call.1} parent=11 // pred_check
          %p397 = pneg %p210
        $region18: #{tpu_custom_call.1} parent=11 // pred_check_branch
          %399 = sbr.rel (%p397) target = $region20
        $region19: #{tpu_custom_call.1} parent=11 // pred_region
          %p400 = scmp.lt.s32.totalorder %s42, 0
          %s401 = scalar_select %p400, %s42, 0
          %s402 = scalar_lea.vmem %s5, %s401
        $region20: #{tpu_custom_call.1} parent=11 // pred_fallthru
          _
        // Predicated region
        $region21: #{tpu_custom_call.1} parent=11 // pred_check
          %p403 = pneg %p236
        $region22: #{tpu_custom_call.1} parent=11 // pred_check_branch
          %405 = sbr.rel (%p403) target = $region24
        $region23: #{tpu_custom_call.1} parent=11 // pred_region
          %407 = vsyncadd [#allocation8], 0
          %s408 = smul.addr %s42, 4
          %s409 = smul.addr %s408, 4
          %s410 = scalar_lea.hbm %s6, %s409
          %s411 = sshll.u32 %s410, 4
          %s412 = int_to_ptr.hbm [resolvable:$true] %s411
          %s413 = sshll.u32 [#allocation9], 4
          %s414 = int_to_ptr.vmem [resolvable:$true] %s413
          %419 = dma.hbm_to_vmem [thread:$0]  %s412, 256, %s414, [#allocation8], 64, 64, 4
        $region24: #{tpu_custom_call.1} parent=11 // pred_fallthru
          _
        // Predicated region
        $region25: #{tpu_custom_call.1} parent=11 // pred_check
          %p420 = pneg %p262
        $region26: #{tpu_custom_call.1} parent=11 // pred_check_branch
          %422 = sbr.rel (%p420) target = $region28
        $region27: #{tpu_custom_call.1} parent=11 // pred_region
          %p423 = scmp.lt.s32.totalorder %s42, 0
          %s424 = scalar_select %p423, %s42, 0
          %s425 = scalar_lea.vmem %s7, %s424
        $region28: #{tpu_custom_call.1} parent=11 // pred_fallthru
          _
        // Predicated region
        $region29: #{tpu_custom_call.1} parent=11 // pred_check
          %p426 = pneg %p288
        $region30: #{tpu_custom_call.1} parent=11 // pred_check_branch
          %428 = sbr.rel (%p426) target = $region32
        $region31: #{tpu_custom_call.1} parent=11 // pred_region
          %430 = vsyncadd [#allocation11], 0
          %s431 = smul.addr %s42, 4
          %s432 = smul.addr %s431, 4
          %s433 = scalar_lea.hbm %s8, %s432
          %s434 = sshll.u32 %s433, 4
          %s435 = int_to_ptr.hbm [resolvable:$true] %s434
          %s436 = sshll.u32 [#allocation10], 4
          %s437 = int_to_ptr.vmem [resolvable:$true] %s436
          %442 = dma.hbm_to_vmem [thread:$0]  %s435, 256, %s437, [#allocation11], 64, 64, 4
        $region32: #{tpu_custom_call.1} parent=11 // pred_fallthru
          _
        // Predicated region
        $region33: #{tpu_custom_call.1} parent=11 // pred_check
          %p443 = pneg %p314
        $region34: #{tpu_custom_call.1} parent=11 // pred_check_branch
          %445 = sbr.rel (%p443) target = $region36
        $region35: #{tpu_custom_call.1} parent=11 // pred_region
          %p446 = scmp.lt.s32.totalorder %s42, 0
          %s447 = scalar_select %p446, %s42, 0
          %s448 = scalar_lea.vmem %s9, %s447
        $region36: #{tpu_custom_call.1} parent=11 // pred_fallthru
          _
      $region12: #{tpu_custom_call.1} parent=5 // pred_fallthru
        _
      %p449 = scmp.lt.s32.totalorder %s31, 2
      // Predicated region
      $region37: #{tpu_custom_call.1} parent=5 // pred_check
        %p450 = pneg %p449
      $region38: #{tpu_custom_call.1} parent=5 // pred_check_branch
        %452 = sbr.rel (%p450) target = $region40
      $region39: #{tpu_custom_call.1} parent=5 // pred_region
        // Predicated region
        $region41: #{tpu_custom_call.1} parent=39 // pred_check
          %p453 = pneg %p72
        $region42: #{tpu_custom_call.1} parent=39 // pred_check_branch
          %455 = sbr.rel (%p453) target = $region44
        $region43: #{tpu_custom_call.1} parent=39 // pred_region
          %s456 = sand.u32 %s62, 1
          %s457 = scalar_lea.sflag [#allocation5], %s456
          %s458 = sand.u32 %s62, 1
          %s459 = smul.addr %s458, 4
          %s460 = scalar_lea.vmem [#allocation4], %s459
          %462 = vsyncadd %s457, 0
          %s463 = sadd.s32 %s40, %s38
          %s464 = smul.addr %s463, 4
          %s465 = scalar_lea.hbm %s0, %s464
          %s467 = sshll.u32 %s465, 4
          %s468 = int_to_ptr.hbm [resolvable:$true] %s467
          %s469 = sshll.u32 %s460, 4
          %s470 = int_to_ptr.vmem [resolvable:$true] %s469
          %472 = dma.hbm_to_vmem [thread:$0]  %s468, 64, %s470, %s457
        $region44: #{tpu_custom_call.1} parent=39 // pred_fallthru
          _
        // Predicated region
        $region45: #{tpu_custom_call.1} parent=39 // pred_check
          %p473 = pneg %p98
        $region46: #{tpu_custom_call.1} parent=39 // pred_check_branch
          %475 = sbr.rel (%p473) target = $region48
        $region47: #{tpu_custom_call.1} parent=39 // pred_region
          %s476 = sand.u32 %s31, 1
          %s477 = scalar_lea.sflag [#allocation8], %s476
          %s478 = sand.u32 %s88, 1
          %s479 = smul.addr %s478, 4
          %s480 = scalar_lea.vmem [#allocation7], %s479
          %482 = vsyncadd %s477, 0
          %s483 = smul.addr %s38, 4
          %s484 = scalar_lea.hbm %s1, %s483
          %s486 = sshll.u32 %s484, 4
          %s487 = int_to_ptr.hbm [resolvable:$true] %s486
          %s488 = sshll.u32 %s480, 4
          %s489 = int_to_ptr.vmem [resolvable:$true] %s488
          %491 = dma.hbm_to_vmem [thread:$0]  %s487, 64, %s489, %s477
        $region48: #{tpu_custom_call.1} parent=39 // pred_fallthru
          _
        // Predicated region
        $region49: #{tpu_custom_call.1} parent=39 // pred_check
          %p492 = pneg %p124
        $region50: #{tpu_custom_call.1} parent=39 // pred_check_branch
          %494 = sbr.rel (%p492) target = $region52
        $region51: #{tpu_custom_call.1} parent=39 // pred_region
          %p495 = scmp.lt.s32.totalorder %s38, 1
          %s496 = scalar_select %p495, %s38, 1
          %s497 = scalar_lea.vmem %s2, %s496
        $region52: #{tpu_custom_call.1} parent=39 // pred_fallthru
          _
        // Predicated region
        $region53: #{tpu_custom_call.1} parent=39 // pred_check
          %p498 = pneg %p152
        $region54: #{tpu_custom_call.1} parent=39 // pred_check_branch
          %500 = sbr.rel (%p498) target = $region56
        $region55: #{tpu_custom_call.1} parent=39 // pred_region
          %p501 = scmp.lt.s32.totalorder %s38, 1
          %s502 = scalar_select %p501, %s38, 1
          %p503 = scmp.lt.s32.totalorder %s40, 0
          %s504 = scalar_select %p503, %s40, 0
          %s505 = sadd.s32 %s504, %s502
          %s506 = smul.addr %s505, 8
          %s507 = scalar_lea.vmem %s3, %s506
        $region56: #{tpu_custom_call.1} parent=39 // pred_fallthru
          _
      $region40: #{tpu_custom_call.1} parent=5 // pred_fallthru
        _
      %p508 = scmp.le.s32.totalorder 1, %s31
      %p509 = scmp.lt.s32.totalorder %s31, 3
      %p510 = pnand %p508, %p509
      %p511 = pneg %p510
      // Predicated region
      $region57: #{tpu_custom_call.1} parent=5 // pred_check
        _
      $region58: #{tpu_custom_call.1} parent=5 // pred_check_branch
        %513 = sbr.rel (%p510) target = $region60
      $region59: #{tpu_custom_call.1} parent=5 // pred_region
        %s514 = ssub.s32 %s31, 1
        %s515 = sand.u32 %s65, 1
        %s516 = scalar_lea.sflag [#allocation5], %s515
        %s517 = sand.u32 %s65, 1
        %s518 = smul.addr %s517, 4
        %s519 = scalar_lea.vmem [#allocation4], %s518
        // Predicated region
        $region61: #{tpu_custom_call.1} parent=59 // pred_check
          %p520 = pneg %p78
        $region62: #{tpu_custom_call.1} parent=59 // pred_check_branch
          %522 = sbr.rel (%p520) target = $region64
        $region63: #{tpu_custom_call.1} parent=59 // pred_region
          %524 = dma.done %s516, 64
        $region64: #{tpu_custom_call.1} parent=59 // pred_fallthru
          _
        %s525 = sand.u32 %s36, 1
        %s526 = scalar_lea.sflag [#allocation8], %s525
        %s527 = sand.u32 %s91, 1
        %s528 = smul.addr %s527, 4
        %s529 = scalar_lea.vmem [#allocation7], %s528
        // Predicated region
        $region65: #{tpu_custom_call.1} parent=59 // pred_check
          %p530 = pneg %p104
        $region66: #{tpu_custom_call.1} parent=59 // pred_check_branch
          %532 = sbr.rel (%p530) target = $region68
        $region67: #{tpu_custom_call.1} parent=59 // pred_region
          %534 = dma.done %s526, 64
        $region68: #{tpu_custom_call.1} parent=59 // pred_fallthru
          _
        // Predicated region
        $region69: #{tpu_custom_call.1} parent=59 // pred_check
          %p535 = pneg %p236
        $region70: #{tpu_custom_call.1} parent=59 // pred_check_branch
          %537 = sbr.rel (%p535) target = $region72
        $region71: #{tpu_custom_call.1} parent=59 // pred_region
          %539 = dma.done [#allocation8], 256
        $region72: #{tpu_custom_call.1} parent=59 // pred_fallthru
          _
        // Predicated region
        $region73: #{tpu_custom_call.1} parent=59 // pred_check
          %p540 = pneg %p288
        $region74: #{tpu_custom_call.1} parent=59 // pred_check_branch
          %542 = sbr.rel (%p540) target = $region76
        $region75: #{tpu_custom_call.1} parent=59 // pred_region
          %544 = dma.done [#allocation11], 256
        $region76: #{tpu_custom_call.1} parent=59 // pred_fallthru
          _
        %s545 = sand.u32 %s65, 1
        %s546 = scalar_lea.sflag [#allocation5], %s545
        %s547 = sand.u32 %s65, 1
        %s548 = smul.addr %s547, 4
        %s549 = scalar_lea.vmem [#allocation4], %s548
        %p550 = pneg %p78
        %p551 = pneg %p75
        %s552 = sand.u32 %s36, 1
        %s553 = scalar_lea.sflag [#allocation8], %s552
        %s554 = sand.u32 %s91, 1
        %s555 = smul.addr %s554, 4
        %s556 = scalar_lea.vmem [#allocation7], %s555
        %p557 = pneg %p104
        %p558 = pneg %p101
        %p559 = scmp.lt.s32.totalorder %s41, 1
        %s560 = scalar_select %p559, %s41, 1
        %s561 = scalar_lea.vmem %s2, %s560
        %p562 = pneg %p130
        %p563 = pneg %p127
        %p564 = scmp.lt.s32.totalorder %s41, 1
        %s565 = scalar_select %p564, %s41, 1
        %p566 = scmp.lt.s32.totalorder %s43, 0
        %s567 = scalar_select %p566, %s43, 0
        %s568 = sadd.s32 %s567, %s565
        %s569 = smul.addr %s568, 8
        %s570 = scalar_lea.vmem %s3, %s569
        %p571 = pneg %p158
        %p572 = pneg %p155
        %p573 = scmp.lt.s32.totalorder %s42, 0
        %s574 = scalar_select %p573, %s42, 0
        %s575 = smul.addr %s574, 4
        %s576 = smul.addr %s575, 4
        %s577 = scalar_lea.vmem %s4, %s576
        %p578 = pneg %p184
        %p579 = pneg %p181
        %p580 = scmp.lt.s32.totalorder %s42, 0
        %s581 = scalar_select %p580, %s42, 0
        %s582 = scalar_lea.vmem %s5, %s581
        %p583 = pneg %p210
        %p584 = pneg %p207
        %p585 = pneg %p236
        %p586 = pneg %p233
        %p587 = scmp.lt.s32.totalorder %s42, 0
        %s588 = scalar_select %p587, %s42, 0
        %s589 = scalar_lea.vmem %s7, %s588
        %p590 = pneg %p262
        %p591 = pneg %p259
        %p592 = pneg %p288
        %p593 = pneg %p285
        %p594 = scmp.lt.s32.totalorder %s42, 0
        %s595 = scalar_select %p594, %s42, 0
        %s596 = scalar_lea.vmem %s9, %s595
        %p597 = pneg %p314
        %p598 = pneg %p311
        %p599 = pneg %p344
        %p600 = pneg %p341
        %s601 = sand.u32 %s331, 1
        %s602 = scalar_lea.sflag [#allocation6], %s601
        %s603 = sand.u32 %s331, 1
        %s604 = smul.addr %s603, 8
        %s605 = scalar_lea.vmem [#allocation12], %s604
        %p606 = pneg %p374
        %p607 = pneg %p371
        %s608 = sand.u32 %s361, 1
        %s609 = scalar_lea.sflag [#allocation14], %s608
        %s610 = sand.u32 %s361, 1
        %s611 = smul.addr %s610, 16
        %s612 = scalar_lea.vmem [#allocation13], %s611
        %p613 = scmp.lt.s32.totalorder %s41, 1
        %s614 = scalar_select %p613, %s41, 1
        %s615 = scalar_lea.vmem %s2, %s614
        %p616 = scmp.lt.s32.totalorder %s41, 1
        %s617 = scalar_select %p616, %s41, 1
        %p618 = scmp.lt.s32.totalorder %s43, 0
        %s619 = scalar_select %p618, %s43, 0
        %s620 = sadd.s32 %s619, %s617
        %s621 = smul.addr %s620, 8
        %s622 = scalar_lea.vmem %s3, %s621
        %p623 = scmp.lt.s32.totalorder %s42, 0
        %s624 = scalar_select %p623, %s42, 0
        %s625 = smul.addr %s624, 4
        %s626 = smul.addr %s625, 4
        %s627 = scalar_lea.vmem %s4, %s626
        %p628 = scmp.lt.s32.totalorder %s42, 0
        %s629 = scalar_select %p628, %s42, 0
        %s630 = scalar_lea.vmem %s5, %s629
        %p631 = scmp.lt.s32.totalorder %s42, 0
        %s632 = scalar_select %p631, %s42, 0
        %s633 = scalar_lea.vmem %s7, %s632
        %p634 = scmp.lt.s32.totalorder %s42, 0
        %s635 = scalar_select %p634, %s42, 0
        %s636 = scalar_lea.vmem %s9, %s635
        %s637 = smul.u32 4, %s42
        %p639 = scmp.eq.s32.totalorder %s43, 0
        // Predicated region
        $region77: #{tpu_custom_call.1} parent=59 // pred_check
          %p640 = pneg %p639
        $region78: #{tpu_custom_call.1} parent=59 // pred_check_branch
          %642 = sbr.rel (%p640) target = $region80
        $region79: #{tpu_custom_call.1} parent=59 // pred_region
          %v643 = vld [vmem:[%s529] sm:$0xf]
          %v644 = vld [vmem:[#allocation9] sm:$0xf]
          %v645 = vld [vmem:[#allocation9 + $0x4] sm:$0xf]
          %v646 = vld [vmem:[#allocation9 + $0x8] sm:$0xf]
          %v647 = vld [vmem:[#allocation9 + $0xc] sm:$0xf]
          %v648 = vld [vmem:[%s633] sm:$0x1]
          %v650 = vperm.slane %v648, 0
          %v656 = vunpack.c.l.b16 %v644
          %v657 = vunpack.c.l.b16 %v645
          %v658 = vunpack.c.l.b16 %v646
          %v659 = vunpack.c.l.b16 %v647
          %v660 = vpack.c.b16 %v657, %v656
          %v661 = vpack.c.b16 %v659, %v658
          %vm664 = vcmask 261120
          %v666 = vsel %vm664, %v643, 0
          %668 = vmatpush.bf16.msra.mxu0 0
          %669 = vmatpush.bf16.msra.mxu0 0
          %670 = vmatpush.bf16.msra.mxu0 0
          %671 = vmatpush.bf16.msra.mxu0 0
          %672 = vmatpush.bf16.msra.mxu0 0
          %673 = vmatpush.bf16.msra.mxu0 0
          %674 = vmatpush.bf16.msra.mxu0 %v661
          %675 = vmatpush.bf16.msra.mxu0 %v660
          %676 = vmatmul.bf16.gmra.mxu0 %v666
          %v677 = vpop.f32.mrf.mxu0
          %v678 = vadd.f32 %v650, %v677
          %v679 = vpop.f32.mrf.mxu0
          %680 = vdwg.mxu0
          %v681 = vld [vmem:[#allocation10] sm:$0xf]
          %v682 = vld [vmem:[#allocation10 + $0x4] sm:$0xf]
          %v683 = vld [vmem:[#allocation10 + $0x8] sm:$0xf]
          %v684 = vld [vmem:[#allocation10 + $0xc] sm:$0xf]
          %v685 = vld [vmem:[%s636] sm:$0x1]
          %v687 = vperm.slane %v685, 0
          %v693 = vunpack.c.l.b16 %v681
          %v694 = vunpack.c.l.b16 %v682
          %v695 = vunpack.c.l.b16 %v683
          %v696 = vunpack.c.l.b16 %v684
          %v697 = vpack.c.b16 %v694, %v693
          %v698 = vpack.c.b16 %v696, %v695
          %701 = vmatpush.bf16.msra.mxu0 0
          %702 = vmatpush.bf16.msra.mxu0 0
          %703 = vmatpush.bf16.msra.mxu0 0
          %704 = vmatpush.bf16.msra.mxu0 0
          %705 = vmatpush.bf16.msra.mxu0 0
          %706 = vmatpush.bf16.msra.mxu0 0
          %707 = vmatpush.bf16.msra.mxu0 %v698
          %708 = vmatpush.bf16.msra.mxu0 %v697
          %709 = vmatmul.bf16.gmra.mxu0 %v666
          %v710 = vpop.f32.mrf.mxu0
          %v711 = vadd.f32 %v687, %v710
          %v712 = vpop.f32.mrf.mxu0
          %713 = vdwg.mxu0
          %v714 = vpack.c.bf16 %v678, %v678
          %vm715 = vcmask 257024
          %716 = vst.msk [vmem:[#allocation2] sm:$0xf] %vm715, %v714
          %v717 = vpack.c.bf16 %v711, %v711
          %718 = vst.msk [vmem:[#allocation3] sm:$0xf] %vm715, %v717
        $region80: #{tpu_custom_call.1} parent=59 // pred_fallthru
          _
        %v719 = vld [vmem:[%s519] sm:$0xf]
        %v720 = vld [vmem:[%s627] sm:$0xf]
        %v721 = vld [vmem:[%s627 + $0x4] sm:$0xf]
        %v722 = vld [vmem:[%s627 + $0x8] sm:$0xf]
        %v723 = vld [vmem:[%s627 + $0xc] sm:$0xf]
        %v724 = vld [vmem:[%s630] sm:$0x1]
        %v726 = vperm.slane %v724, 0
        %v732 = vunpack.c.l.b16 %v720
        %v733 = vunpack.c.l.b16 %v721
        %v734 = vunpack.c.l.b16 %v722
        %v735 = vunpack.c.l.b16 %v723
        %v736 = vpack.c.b16 %v733, %v732
        %v737 = vpack.c.b16 %v735, %v734
        %vm740 = vcmask 261120
        %v742 = vsel %vm740, %v719, 0
        %744 = vmatpush.bf16.msra.mxu0 0
        %745 = vmatpush.bf16.msra.mxu0 0
        %746 = vmatpush.bf16.msra.mxu0 0
        %747 = vmatpush.bf16.msra.mxu0 0
        %748 = vmatpush.bf16.msra.mxu0 0
        %749 = vmatpush.bf16.msra.mxu0 0
        %750 = vmatpush.bf16.msra.mxu0 %v737
        %751 = vmatpush.bf16.msra.mxu0 %v736
        %752 = vmatmul.bf16.gmra.mxu0 %v742
        %v753 = vpop.f32.mrf.mxu0
        %v754 = vadd.f32 %v726, %v753
        %v755 = vpop.f32.mrf.mxu0
        %756 = vdwg.mxu0
        %v757 = vpack.c.bf16 %v754, %v754
        %v758 = vld [vmem:[%s615] sm:$0x1]
        %vm759 = vcmp.gt.f32.partialorder %v758, 0.0
        %v760 = vld [vmem:[%s622] sm:$0xff]
        %v761 = vld [vmem:[#allocation2] sm:$0xf]
        %vm762 = vcmask 64512
        %v764 = vsel %vm762, %v757, 0
        %v767 = vsel %vm762, %v761, 0
        %769 = vmatpush.bf16.xpose.msra.mxu0 0
        %770 = vmatpush.bf16.xpose.msra.mxu0 0
        %771 = vmatpush.bf16.xpose.msra.mxu0 0
        %772 = vmatpush.bf16.xpose.msra.mxu0 0
        %773 = vmatpush.bf16.xpose.msra.mxu0 0
        %774 = vmatpush.bf16.xpose.msra.mxu0 0
        %775 = vmatpush.bf16.xpose.msra.mxu0 0
        %776 = vmatpush.bf16.xpose.msra.mxu0 %v767
        %777 = vmatmul.bf16.gmra.mxu0 %v764
        %v778 = vpop.f32.mrf.mxu0
        %v779 = vadd.f32 0.0, %v778
        %v780 = vpop.f32.mrf.mxu0
        %781 = vdwg.mxu0
        %v782 = vsel %vm759, 1, 0
        %v783 = vperm.slane %v782, 0
        %vm784 = vcmp.eq.s32.totalorder %v783, 1
        %v785 = vsel %vm784, %v779, -inf
        %v786 = vsel %vm762, %v785, -inf
        %787 = vmax.xlane.f32.xlu0 %v786
        %v788 = vpop.xlane.xlu0 %787
        %vm789 = vcmp.gt.f32.partialorder %v788, -inf
        %v790 = vsel %vm789, %v788, 0.0
        %v791 = vsub.f32 %v785, %v790
        %v792 = vmul.f32 %v791, 1.442695
        %v793 = vpow.pop %v792
        %v794 = vsel %vm762, %v793, 0.0
        %795 = vadd.xlane.f32.xlu0 %v794
        %v796 = vpop.xlane.xlu0 %795
        %vm797 = vcmp.gt.f32.partialorder %v796, 0.0
        %v798 = vsel %vm797, %v796, 1.0
        %v799 = vrcp.pop %v798
        %v800 = vmul.f32 %v793, %v799
        %802 = vset.pattern.permute.xlu0 0
        %803 = vperm.xlu0 %802, %v760
        %v804 = vpop.permute.xlu0 %803
        %v806 = vmul.f32 %v800, %v804
        %v807 = vpack.c.bf16 %v806, %v806
        %vm808 = vcmask 60416
        %809 = vst.msk [vmem:[%s612] sm:$0xf] %vm808, %v807
        %v810 = vld [vmem:[#allocation3] sm:$0xf]
        %v812 = vsel %vm762, %v807, 0
        %vm814 = vcmask 1043456
        %v816 = vsel %vm814, %v810, 0
        %818 = vmatpush.bf16.msra.mxu0 0
        %819 = vmatpush.bf16.msra.mxu0 0
        %820 = vmatpush.bf16.msra.mxu0 0
        %821 = vmatpush.bf16.msra.mxu0 0
        %822 = vmatpush.bf16.msra.mxu0 0
        %823 = vmatpush.bf16.msra.mxu0 0
        %824 = vmatpush.bf16.msra.mxu0 0
        %825 = vmatpush.bf16.msra.mxu0 %v816
        %826 = vmatmul.bf16.gmra.mxu0 %v812
        %v827 = vpop.f32.mrf.mxu0
        %v828 = vadd.f32 0.0, %v827
        %v829 = vpop.f32.mrf.mxu0
        %830 = vdwg.mxu0
        %831 = vst.msk [vmem:[%s605] sm:$0xff] %vm762, %v828
        %v832 = vld [vmem:[#allocation2] sm:$0xf]
        %v834 = vunpack.c.l.b16 %v757
        %v835 = vpack.c.b16 %v834, %v834
        %836 = vrot.lane.b32.xlu0 %v835, 120
        %v837 = vpop.permute.xlu0 %836
        %v839 = vunpack.c.l.b16 %v832
        %v840 = vpack.c.b16 %v839, %v839
        %841 = vrot.lane.b32.xlu0 %v840, 120
        %v842 = vpop.permute.xlu0 %841
        %v844 = vsel %vm762, %v837, 0
        %v847 = vsel %vm762, %v842, 0
        %849 = vmatpush.bf16.xpose.msra.mxu0 0
        %850 = vmatpush.bf16.xpose.msra.mxu0 0
        %851 = vmatpush.bf16.xpose.msra.mxu0 0
        %852 = vmatpush.bf16.xpose.msra.mxu0 0
        %853 = vmatpush.bf16.xpose.msra.mxu0 0
        %854 = vmatpush.bf16.xpose.msra.mxu0 0
        %855 = vmatpush.bf16.xpose.msra.mxu0 0
        %856 = vmatpush.bf16.xpose.msra.mxu0 %v847
        %857 = vmatmul.bf16.gmra.mxu0 %v844
        %v858 = vpop.f32.mrf.mxu0
        %v859 = vadd.f32 0.0, %v858
        %v860 = vpop.f32.mrf.mxu0
        %861 = vdwg.mxu0
        %v862 = vsel %vm784, %v859, -inf
        %v863 = vsel %vm762, %v862, -inf
        %864 = vmax.xlane.f32.xlu0 %v863
        %v865 = vpop.xlane.xlu0 %864
        %vm866 = vcmp.gt.f32.partialorder %v865, -inf
        %v867 = vsel %vm866, %v865, 0.0
        %v868 = vsub.f32 %v862, %v867
        %v869 = vmul.f32 %v868, 1.442695
        %v870 = vpow.pop %v869
        %v871 = vsel %vm762, %v870, 0.0
        %872 = vadd.xlane.f32.xlu0 %v871
        %v873 = vpop.xlane.xlu0 %872
        %vm874 = vcmp.gt.f32.partialorder %v873, 0.0
        %v875 = vsel %vm874, %v873, 1.0
        %v876 = vrcp.pop %v875
        %v877 = vmul.f32 %v870, %v876
        %v878 = vmul.f32 %v877, %v804
        %v879 = vpack.c.bf16 %v878, %v878
        %s880 = scalar_lea.vmem %s612, 4 [#allocation13]
        %881 = vst.msk [vmem:[%s880] sm:$0xf] %vm808, %v879
        %v882 = vld [vmem:[#allocation3] sm:$0xf]
        %v884 = vunpack.c.l.b16 %v882
        %v885 = vpack.c.b16 %v884, %v884
        %886 = vrot.lane.b32.xlu0 %v885, 120
        %v887 = vpop.permute.xlu0 %886
        %v889 = vsel %vm762, %v879, 0
        %v892 = vsel %vm814, %v887, 0
        %894 = vmatpush.bf16.msra.mxu0 0
        %895 = vmatpush.bf16.msra.mxu0 0
        %896 = vmatpush.bf16.msra.mxu0 0
        %897 = vmatpush.bf16.msra.mxu0 0
        %898 = vmatpush.bf16.msra.mxu0 0
        %899 = vmatpush.bf16.msra.mxu0 0
        %900 = vmatpush.bf16.msra.mxu0 0
        %901 = vmatpush.bf16.msra.mxu0 %v892
        %902 = vmatmul.bf16.gmra.mxu0 %v889
        %v903 = vpop.f32.mrf.mxu0
        %v904 = vadd.f32 0.0, %v903
        %v905 = vpop.f32.mrf.mxu0
        %906 = vdwg.mxu0
        %908 = vrot.lane.b32.xlu0 %v904, 8
        %v909 = vpop.permute.xlu0 %908
        %vm911 = vcmask 130112
        %912 = vst.msk [vmem:[%s605] sm:$0xff] %vm911, %v909
        %v913 = vld [vmem:[#allocation2] sm:$0xf]
        %914 = vrot.lane.b32.xlu0 %v835, 112
        %v915 = vpop.permute.xlu0 %914
        %v917 = vunpack.c.l.b16 %v913
        %v918 = vpack.c.b16 %v917, %v917
        %919 = vrot.lane.b32.xlu0 %v918, 112
        %v920 = vpop.permute.xlu0 %919
        %v922 = vsel %vm762, %v915, 0
        %v925 = vsel %vm762, %v920, 0
        %927 = vmatpush.bf16.xpose.msra.mxu0 0
        %928 = vmatpush.bf16.xpose.msra.mxu0 0
        %929 = vmatpush.bf16.xpose.msra.mxu0 0
        %930 = vmatpush.bf16.xpose.msra.mxu0 0
        %931 = vmatpush.bf16.xpose.msra.mxu0 0
        %932 = vmatpush.bf16.xpose.msra.mxu0 0
        %933 = vmatpush.bf16.xpose.msra.mxu0 0
        %934 = vmatpush.bf16.xpose.msra.mxu0 %v925
        %935 = vmatmul.bf16.gmra.mxu0 %v922
        %v936 = vpop.f32.mrf.mxu0
        %v937 = vadd.f32 0.0, %v936
        %v938 = vpop.f32.mrf.mxu0
        %939 = vdwg.mxu0
        %v940 = vsel %vm784, %v937, -inf
        %v941 = vsel %vm762, %v940, -inf
        %942 = vmax.xlane.f32.xlu0 %v941
        %v943 = vpop.xlane.xlu0 %942
        %vm944 = vcmp.gt.f32.partialorder %v943, -inf
        %v945 = vsel %vm944, %v943, 0.0
        %v946 = vsub.f32 %v940, %v945
        %v947 = vmul.f32 %v946, 1.442695
        %v948 = vpow.pop %v947
        %v949 = vsel %vm762, %v948, 0.0
        %950 = vadd.xlane.f32.xlu0 %v949
        %v951 = vpop.xlane.xlu0 %950
        %vm952 = vcmp.gt.f32.partialorder %v951, 0.0
        %v953 = vsel %vm952, %v951, 1.0
        %v954 = vrcp.pop %v953
        %v955 = vmul.f32 %v948, %v954
        %v956 = vmul.f32 %v955, %v804
        %v957 = vpack.c.bf16 %v956, %v956
        %s958 = scalar_lea.vmem %s612, 8 [#allocation13]
        %959 = vst.msk [vmem:[%s958] sm:$0xf] %vm808, %v957
        %v960 = vld [vmem:[#allocation3] sm:$0xf]
        %v962 = vunpack.c.l.b16 %v960
        %v963 = vpack.c.b16 %v962, %v962
        %964 = vrot.lane.b32.xlu0 %v963, 112
        %v965 = vpop.permute.xlu0 %964
        %v967 = vsel %vm762, %v957, 0
        %v970 = vsel %vm814, %v965, 0
        %972 = vmatpush.bf16.msra.mxu0 0
        %973 = vmatpush.bf16.msra.mxu0 0
        %974 = vmatpush.bf16.msra.mxu0 0
        %975 = vmatpush.bf16.msra.mxu0 0
        %976 = vmatpush.bf16.msra.mxu0 0
        %977 = vmatpush.bf16.msra.mxu0 0
        %978 = vmatpush.bf16.msra.mxu0 0
        %979 = vmatpush.bf16.msra.mxu0 %v970
        %980 = vmatmul.bf16.gmra.mxu0 %v967
        %v981 = vpop.f32.mrf.mxu0
        %v982 = vadd.f32 0.0, %v981
        %v983 = vpop.f32.mrf.mxu0
        %984 = vdwg.mxu0
        %986 = vrot.lane.b32.xlu0 %v982, 16
        %v987 = vpop.permute.xlu0 %986
        %vm989 = vcmask 195712
        %990 = vst.msk [vmem:[%s605] sm:$0xff] %vm989, %v987
        %v991 = vld [vmem:[#allocation2] sm:$0xf]
        %992 = vrot.lane.b32.xlu0 %v835, 104
        %v993 = vpop.permute.xlu0 %992
        %v995 = vunpack.c.l.b16 %v991
        %v996 = vpack.c.b16 %v995, %v995
        %997 = vrot.lane.b32.xlu0 %v996, 104
        %v998 = vpop.permute.xlu0 %997
        %v1000 = vsel %vm762, %v993, 0
        %v1003 = vsel %vm762, %v998, 0
        %1005 = vmatpush.bf16.xpose.msra.mxu0 0
        %1006 = vmatpush.bf16.xpose.msra.mxu0 0
        %1007 = vmatpush.bf16.xpose.msra.mxu0 0
        %1008 = vmatpush.bf16.xpose.msra.mxu0 0
        %1009 = vmatpush.bf16.xpose.msra.mxu0 0
        %1010 = vmatpush.bf16.xpose.msra.mxu0 0
        %1011 = vmatpush.bf16.xpose.msra.mxu0 0
        %1012 = vmatpush.bf16.xpose.msra.mxu0 %v1003
        %1013 = vmatmul.bf16.gmra.mxu0 %v1000
        %v1014 = vpop.f32.mrf.mxu0
        %v1015 = vadd.f32 0.0, %v1014
        %v1016 = vpop.f32.mrf.mxu0
        %1017 = vdwg.mxu0
        %v1018 = vsel %vm784, %v1015, -inf
        %v1019 = vsel %vm762, %v1018, -inf
        %1020 = vmax.xlane.f32.xlu0 %v1019
        %v1021 = vpop.xlane.xlu0 %1020
        %vm1022 = vcmp.gt.f32.partialorder %v1021, -inf
        %v1023 = vsel %vm1022, %v1021, 0.0
        %v1024 = vsub.f32 %v1018, %v1023
        %v1025 = vmul.f32 %v1024, 1.442695
        %v1026 = vpow.pop %v1025
        %v1027 = vsel %vm762, %v1026, 0.0
        %1028 = vadd.xlane.f32.xlu0 %v1027
        %v1029 = vpop.xlane.xlu0 %1028
        %vm1030 = vcmp.gt.f32.partialorder %v1029, 0.0
        %v1031 = vsel %vm1030, %v1029, 1.0
        %v1032 = vrcp.pop %v1031
        %v1033 = vmul.f32 %v1026, %v1032
        %v1034 = vmul.f32 %v1033, %v804
        %v1035 = vpack.c.bf16 %v1034, %v1034
        %s1036 = scalar_lea.vmem %s612, 12 [#allocation13]
        %1037 = vst.msk [vmem:[%s1036] sm:$0xf] %vm808, %v1035
        %v1038 = vld [vmem:[#allocation3] sm:$0xf]
        %v1040 = vunpack.c.l.b16 %v1038
        %v1041 = vpack.c.b16 %v1040, %v1040
        %1042 = vrot.lane.b32.xlu0 %v1041, 104
        %v1043 = vpop.permute.xlu0 %1042
        %v1045 = vsel %vm762, %v1035, 0
        %v1048 = vsel %vm814, %v1043, 0
        %1050 = vmatpush.bf16.msra.mxu0 0
        %1051 = vmatpush.bf16.msra.mxu0 0
        %1052 = vmatpush.bf16.msra.mxu0 0
        %1053 = vmatpush.bf16.msra.mxu0 0
        %1054 = vmatpush.bf16.msra.mxu0 0
        %1055 = vmatpush.bf16.msra.mxu0 0
        %1056 = vmatpush.bf16.msra.mxu0 0
        %1057 = vmatpush.bf16.msra.mxu0 %v1048
        %1058 = vmatmul.bf16.gmra.mxu0 %v1045
        %v1059 = vpop.f32.mrf.mxu0
        %v1060 = vadd.f32 0.0, %v1059
        %v1061 = vpop.f32.mrf.mxu0
        %1062 = vdwg.mxu0
        %1064 = vrot.lane.b32.xlu0 %v1060, 24
        %v1065 = vpop.permute.xlu0 %1064
        %vm1067 = vcmask 261312
        %1068 = vst.msk [vmem:[%s605] sm:$0xff] %vm1067, %v1065
        %s1069 = sand.u32 %s331, 1
        %s1070 = scalar_lea.sflag [#allocation6], %s1069
        %s1071 = sand.u32 %s331, 1
        %s1072 = smul.addr %s1071, 8
        %s1073 = scalar_lea.vmem [#allocation12], %s1072
        %s1074 = sand.u32 %s361, 1
        %s1075 = scalar_lea.sflag [#allocation14], %s1074
        %s1076 = sand.u32 %s361, 1
        %s1077 = smul.addr %s1076, 16
        %s1078 = scalar_lea.vmem [#allocation13], %s1077
        // Predicated region
        $region81: #{tpu_custom_call.1} parent=59 // pred_check
          %p1079 = pneg %p341
        $region82: #{tpu_custom_call.1} parent=59 // pred_check_branch
          %1081 = sbr.rel (%p1079) target = $region84
        $region83: #{tpu_custom_call.1} parent=59 // pred_region
          %1083 = vsyncadd %s1070, 0
          %s1084 = sadd.s32 %s42, %s43
          %s1085 = sadd.s32 %s1084, %s41
          %s1086 = smul.addr %s1085, 8
          %s1087 = scalar_lea.hbm %s10, %s1086
          %s1089 = sshll.u32 %s1073, 4
          %s1090 = int_to_ptr.vmem [resolvable:$true] %s1089
          %s1091 = sshll.u32 %s1087, 4
          %s1092 = int_to_ptr.hbm [resolvable:$true] %s1091
          %1094 = dma.vmem_to_hbm [thread:$0]  %s1090, 128, %s1092, %s1070
        $region84: #{tpu_custom_call.1} parent=59 // pred_fallthru
          _
        // Predicated region
        $region85: #{tpu_custom_call.1} parent=59 // pred_check
          %p1095 = pneg %p371
        $region86: #{tpu_custom_call.1} parent=59 // pred_check_branch
          %1097 = sbr.rel (%p1095) target = $region88
        $region87: #{tpu_custom_call.1} parent=59 // pred_region
          %s1098 = smul.u32 4, %s42
          %1100 = vsyncadd %s1075, 0
          %s1101 = sadd.s32 %s43, %s1098
          %s1102 = smul.addr %s41, 4
          %s1103 = sadd.s32 %s1101, %s1102
          %s1104 = smul.addr %s1103, 4
          %s1105 = scalar_lea.hbm %s11, %s1104
          %s1106 = sshll.u32 %s1078, 4
          %s1107 = int_to_ptr.vmem [resolvable:$true] %s1106
          %s1108 = sshll.u32 %s1105, 4
          %s1109 = int_to_ptr.hbm [resolvable:$true] %s1108
          %1114 = dma.vmem_to_hbm [thread:$0]  %s1107, 256, %s1109, %s1075, 64, 64, 4
        $region88: #{tpu_custom_call.1} parent=59 // pred_fallthru
          _
      $region60: #{tpu_custom_call.1} parent=5 // pred_fallthru
        _
      %p1115 = scmp.le.s32.totalorder 2, %s31
      // Predicated region
      $region89: #{tpu_custom_call.1} parent=5 // pred_check
        %p1116 = pneg %p1115
      $region90: #{tpu_custom_call.1} parent=5 // pred_check_branch
        %1118 = sbr.rel (%p1116) target = $region92
      $region91: #{tpu_custom_call.1} parent=5 // pred_region
        %s1119 = ssub.s32 %s31, 2
        // Predicated region
        $region93: #{tpu_custom_call.1} parent=91 // pred_check
          %p1120 = pneg %p347
        $region94: #{tpu_custom_call.1} parent=91 // pred_check_branch
          %1122 = sbr.rel (%p1120) target = $region96
        $region95: #{tpu_custom_call.1} parent=91 // pred_region
          %s1123 = sand.u32 %s332, 1
          %s1124 = scalar_lea.sflag [#allocation6], %s1123
          %s1125 = sand.u32 %s332, 1
          %s1126 = smul.addr %s1125, 8
          %s1127 = scalar_lea.vmem [#allocation12], %s1126
          %1129 = dma.done %s1124, 128
        $region96: #{tpu_custom_call.1} parent=91 // pred_fallthru
          _
        // Predicated region
        $region97: #{tpu_custom_call.1} parent=91 // pred_check
          %p1130 = pneg %p377
        $region98: #{tpu_custom_call.1} parent=91 // pred_check_branch
          %1132 = sbr.rel (%p1130) target = $region100
        $region99: #{tpu_custom_call.1} parent=91 // pred_region
          %s1133 = sand.u32 %s362, 1
          %s1134 = scalar_lea.sflag [#allocation14], %s1133
          %s1135 = sand.u32 %s362, 1
          %s1136 = smul.addr %s1135, 16
          %s1137 = scalar_lea.vmem [#allocation13], %s1136
          %1139 = dma.done %s1134, 256
        $region100: #{tpu_custom_call.1} parent=91 // pred_fallthru
          _
      $region92: #{tpu_custom_call.1} parent=5 // pred_fallthru
        _
    $region6: #{tpu_custom_call.1} parent=1 // loop_footer
      %s35 = sadd.s32 1, %s31
    $region7: #{tpu_custom_call.1} parent=1 // loop_footer_branch
      %30 = sbr.rel target = $region3
    $region8: #{tpu_custom_call.1} parent=1 // loop_exit
      _
    %1140 = vsyncpa [#allocation5], 1
    %s1141 = scalar_lea.sflag [#allocation5], 1
    %1142 = vsyncpa %s1141, 1
    %1143 = vsyncpa [#allocation8], 1
    %s1144 = scalar_lea.sflag [#allocation8], 1
    %1145 = vsyncpa %s1144, 1
    %1146 = vsyncpa [#allocation11], 1
    %1147 = vsyncpa [#allocation6], 1
    %s1148 = scalar_lea.sflag [#allocation6], 1
    %1149 = vsyncpa %s1148, 1
    %1150 = vsyncpa [#allocation14], 1
    %s1151 = scalar_lea.sflag [#allocation14], 1
    %1152 = vsyncpa %s1151, 1

</llo_original>
